<compile_context>
chip_gen: v6e
topology: v6e:2x2x1
jax: 0.10.0
libtpu: 0.0.40
codegen_flags: <defaults>
</compile_context>

<pallas_src>
import functools

import jax
import jax.numpy as jnp
from jax.experimental import pallas as pl
from jax.experimental.pallas import tpu as pltpu


def _conv3x3_gemm(src, w, b, H, W, C):
    """3x3 conv (padding already baked into `src`) as one GEMM.

    src : (H+2, W+2, C) value (zero halo = padding=1)
    w   : (9*C, C)      tap-major weights, K index = (ky*3 + kx)*C + cin
    b   : (1, C)        bias
    returns (H*W, C) = conv(src) + b
    """
    taps = [src[dy:dy + H, dx:dx + W, :].reshape(H * W, C)
            for dy in range(3) for dx in range(3)]
    patches = jnp.concatenate(taps, axis=-1)                       # (H*W, 9*C)
    return jnp.dot(patches, w, preferred_element_type=jnp.float32) + b


def residual_block_kernel(xpad_ref, w1_ref, b1_ref, w2_ref, b2_ref, out_ref,
                          *, H, W, C):
    """One image per grid step.

    xpad_ref : (1, H+2, W+2, C)  zero-padded input (pad=1)
    w1_ref   : (9*C, C)          conv1 weights, tap-major
    b1_ref   : (1, C)            conv1 bias
    w2_ref   : (9*C, C)          conv2 weights, tap-major
    b2_ref   : (1, C)            conv2 bias
    out_ref  : (1, H, W, C)
    """
    xp = xpad_ref[0]                                               # (H+2, W+2, C)

    # ---- conv1 + bias + ReLU : single (H*W, 9C) @ (9C, C) GEMM ----
    y1 = jnp.maximum(_conv3x3_gemm(xp, w1_ref[...], b1_ref[...], H, W, C), 0.0)

    # Re-pad the intermediate in registers (zero halo acts as conv2's padding=1).
    y1_hwc = y1.reshape(H, W, C)
    zcol = jnp.zeros((H, 1, C), jnp.float32)
    zrow = jnp.zeros((1, W + 2, C), jnp.float32)
    y1_pad = jnp.concatenate(
        [zrow, jnp.concatenate([zcol, y1_hwc, zcol], axis=1), zrow], axis=0)

    # ---- conv2 + bias, residual add, ReLU : single GEMM, one slab store ----
    y2 = _conv3x3_gemm(y1_pad, w2_ref[...], b2_ref[...], H, W, C)  # (H*W, C)
    resid = xp[1:H + 1, 1:W + 1, :].reshape(H * W, C)
    out = jnp.maximum(resid + y2, 0.0)
    out_ref[0] = out.reshape(H, W, C).astype(out_ref.dtype)


def residual_block(x_nchw, w1_oihw, b1, w2_oihw, b2):
    """PyTorch-semantics forward: relu(x + conv2(relu(conv1(x)))).  NCHW in, NCHW out."""
    N, C, H, W = x_nchw.shape

    # --- glue: layout conversion + zero padding (pad=1), done in plain JAX ---
    x = jnp.transpose(x_nchw, (0, 2, 3, 1)).astype(jnp.float32)            # NHWC
    xpad = jnp.pad(x, ((0, 0), (1, 1), (1, 1), (0, 0)))
    # OIHW -> (ky, kx, cin, cout) -> (9*C, C): K index = (ky*3 + kx)*C + cin
    w1 = jnp.transpose(w1_oihw, (2, 3, 1, 0)).reshape(9 * C, C).astype(jnp.float32)
    w2 = jnp.transpose(w2_oihw, (2, 3, 1, 0)).reshape(9 * C, C).astype(jnp.float32)
    b1k = b1.reshape(1, C).astype(jnp.float32)
    b2k = b2.reshape(1, C).astype(jnp.float32)

    kernel = functools.partial(residual_block_kernel, H=H, W=W, C=C)

    out_nhwc = pl.pallas_call(
        kernel,
        out_shape=jax.ShapeDtypeStruct((N, H, W, C), jnp.float32),
        grid_spec=pltpu.PrefetchScalarGridSpec(
            num_scalar_prefetch=0,
            grid=(N,),
            in_specs=[
                pl.BlockSpec((1, H + 2, W + 2, C), lambda n: (n, 0, 0, 0)),
                pl.BlockSpec((9 * C, C), lambda n: (0, 0)),
                pl.BlockSpec((1, C), lambda n: (0, 0)),
                pl.BlockSpec((9 * C, C), lambda n: (0, 0)),
                pl.BlockSpec((1, C), lambda n: (0, 0)),
            ],
            out_specs=pl.BlockSpec((1, H, W, C), lambda n: (n, 0, 0, 0)),
        ),
        compiler_params=pltpu.CompilerParams(
            dimension_semantics=("parallel",)),
    )(xpad, w1, b1k, w2, b2k)

    return jnp.transpose(out_nhwc, (0, 3, 1, 2))                            # back to NCHW


def reference_forward(x, w1, b1, w2, b2):
    """Pure-JAX reference matching the PyTorch module (NCHW / OIHW)."""
    dn = ("NCHW", "OIHW", "NCHW")
    y = jax.lax.conv_general_dilated(x, w1, (1, 1), ((1, 1), (1, 1)),
                                     dimension_numbers=dn)
    y = jax.nn.relu(y + b1.reshape(1, -1, 1, 1))
    y = jax.lax.conv_general_dilated(y, w2, (1, 1), ((1, 1), (1, 1)),
                                     dimension_numbers=dn)
    y = y + b2.reshape(1, -1, 1, 1)
    return jax.nn.relu(x + y)


if __name__ == "__main__":
    key = jax.random.PRNGKey(0)
    k_x, k_w1, k_b1, k_w2, k_b2 = jax.random.split(key, 5)

    N, C, H, W = 2, 4, 16, 16
    x = jax.random.normal(k_x, (N, C, H, W), dtype=jnp.float32)

    # Deterministic parameter init mimicking PyTorch's default Conv2d init
    # (uniform in [-1/sqrt(fan_in), 1/sqrt(fan_in)] with fan_in = C*3*3).
    fan_in = C * 3 * 3
    bound = 1.0 / jnp.sqrt(jnp.float32(fan_in))
    w1 = jax.random.uniform(k_w1, (C, C, 3, 3), jnp.float32, -bound, bound)
    b1 = jax.random.uniform(k_b1, (C,), jnp.float32, -bound, bound)
    w2 = jax.random.uniform(k_w2, (C, C, 3, 3), jnp.float32, -bound, bound)
    b2 = jax.random.uniform(k_b2, (C,), jnp.float32, -bound, bound)

    out = residual_block(x, w1, b1, w2, b2)
    out = jax.block_until_ready(out)

    ref = jax.block_until_ready(reference_forward(x, w1, b1, w2, b2))
    assert out.shape == (N, C, H, W)
    assert jnp.max(jnp.abs(out - ref)) < 1e-4, "Pallas kernel mismatch vs reference"

    print("KERNEL_OK")
</pallas_src>

<mosaic_0001>
module attributes {stable_mosaic.version = 11 : i64} {
  func.func @residual_block_kernel(%arg0: i32, %arg1: memref<1x18x18x4xf32, #tpu.memory_space<vmem>>, %arg2: memref<36x4xf32, #tpu.memory_space<vmem>>, %arg3: memref<1x4xf32, #tpu.memory_space<vmem>>, %arg4: memref<36x4xf32, #tpu.memory_space<vmem>>, %arg5: memref<1x4xf32, #tpu.memory_space<vmem>>, %arg6: memref<1x16x16x4xf32, #tpu.memory_space<vmem>>) attributes {dimension_semantics = [#tpu.dimension_semantics<parallel>], iteration_bounds = array<i64: 2>, scalar_prefetch = 0 : i64, scratch_operands = 0 : i64, tpu.core_type = #tpu.core_type<tc>, window_params = [{transform_indices = @transform_0, window_bounds = array<i64: 1, 18, 18, 4>}, {pipeline_mode = #tpu.pipeline_mode<synchronous>, transform_indices = @transform_1, window_bounds = array<i64: 36, 4>}, {pipeline_mode = #tpu.pipeline_mode<synchronous>, transform_indices = @transform_2, window_bounds = array<i64: 1, 4>}, {pipeline_mode = #tpu.pipeline_mode<synchronous>, transform_indices = @transform_3, window_bounds = array<i64: 36, 4>}, {pipeline_mode = #tpu.pipeline_mode<synchronous>, transform_indices = @transform_4, window_bounds = array<i64: 1, 4>}, {transform_indices = @transform_5, window_bounds = array<i64: 1, 16, 16, 4>}]} {
    %c0 = arith.constant 0 : index
    %c0_0 = arith.constant 0 : index
    %c0_1 = arith.constant 0 : index
    %c0_2 = arith.constant 0 : index
    %0 = vector.load %arg1[%c0, %c0_0, %c0_1, %c0_2] : memref<1x18x18x4xf32, #tpu.memory_space<vmem>>, vector<1x18x18x4xf32>
    %1 = vector.shape_cast %0 : vector<1x18x18x4xf32> to vector<18x18x4xf32>
    %c0_3 = arith.constant 0 : index
    %c0_4 = arith.constant 0 : index
    %2 = vector.load %arg2[%c0_3, %c0_4] : memref<36x4xf32, #tpu.memory_space<vmem>>, vector<36x4xf32>
    %c0_5 = arith.constant 0 : index
    %c0_6 = arith.constant 0 : index
    %3 = vector.load %arg3[%c0_5, %c0_6] : memref<1x4xf32, #tpu.memory_space<vmem>>, vector<1x4xf32>
    %4 = vector.extract_strided_slice %1 {offsets = [0, 0, 0], sizes = [16, 16, 4], strides = [1, 1, 1]} : vector<18x18x4xf32> to vector<16x16x4xf32>
    %5 = vector.shape_cast %4 : vector<16x16x4xf32> to vector<256x4xf32>
    %6 = vector.extract_strided_slice %1 {offsets = [0, 1, 0], sizes = [16, 16, 4], strides = [1, 1, 1]} : vector<18x18x4xf32> to vector<16x16x4xf32>
    %7 = vector.shape_cast %6 : vector<16x16x4xf32> to vector<256x4xf32>
    %8 = vector.extract_strided_slice %1 {offsets = [0, 2, 0], sizes = [16, 16, 4], strides = [1, 1, 1]} : vector<18x18x4xf32> to vector<16x16x4xf32>
    %9 = vector.shape_cast %8 : vector<16x16x4xf32> to vector<256x4xf32>
    %10 = vector.extract_strided_slice %1 {offsets = [1, 0, 0], sizes = [16, 16, 4], strides = [1, 1, 1]} : vector<18x18x4xf32> to vector<16x16x4xf32>
    %11 = vector.shape_cast %10 : vector<16x16x4xf32> to vector<256x4xf32>
    %12 = vector.extract_strided_slice %1 {offsets = [1, 1, 0], sizes = [16, 16, 4], strides = [1, 1, 1]} : vector<18x18x4xf32> to vector<16x16x4xf32>
    %13 = vector.shape_cast %12 : vector<16x16x4xf32> to vector<256x4xf32>
    %14 = vector.extract_strided_slice %1 {offsets = [1, 2, 0], sizes = [16, 16, 4], strides = [1, 1, 1]} : vector<18x18x4xf32> to vector<16x16x4xf32>
    %15 = vector.shape_cast %14 : vector<16x16x4xf32> to vector<256x4xf32>
    %16 = vector.extract_strided_slice %1 {offsets = [2, 0, 0], sizes = [16, 16, 4], strides = [1, 1, 1]} : vector<18x18x4xf32> to vector<16x16x4xf32>
    %17 = vector.shape_cast %16 : vector<16x16x4xf32> to vector<256x4xf32>
    %18 = vector.extract_strided_slice %1 {offsets = [2, 1, 0], sizes = [16, 16, 4], strides = [1, 1, 1]} : vector<18x18x4xf32> to vector<16x16x4xf32>
    %19 = vector.shape_cast %18 : vector<16x16x4xf32> to vector<256x4xf32>
    %20 = vector.extract_strided_slice %1 {offsets = [2, 2, 0], sizes = [16, 16, 4], strides = [1, 1, 1]} : vector<18x18x4xf32> to vector<16x16x4xf32>
    %21 = vector.shape_cast %20 : vector<16x16x4xf32> to vector<256x4xf32>
    %22 = tpu.concatenate %5, %7, %9, %11, %13, %15, %17, %19, %21 in 1 : vector<256x4xf32>, vector<256x4xf32>, vector<256x4xf32>, vector<256x4xf32>, vector<256x4xf32>, vector<256x4xf32>, vector<256x4xf32>, vector<256x4xf32>, vector<256x4xf32> -> vector<256x36xf32>
    %cst = arith.constant dense<0.000000e+00> : vector<256x4xf32>
    %23 = tpu.matmul %22, %2, %cst {dimension_numbers = #tpu.dot_dimension_numbers<[1], [0], [0], [1], [0, 0, 1, 1], [], []>} : vector<256x36xf32>, vector<36x4xf32>, vector<256x4xf32> -> vector<256x4xf32>
    %24 = vector.broadcast %3 : vector<1x4xf32> to vector<256x4xf32>
    %25 = arith.addf %23, %24 : vector<256x4xf32>
    %cst_7 = arith.constant 0.000000e+00 : f32
    %26 = vector.broadcast %cst_7 : f32 to vector<256x4xf32>
    %27 = arith.maximumf %25, %26 : vector<256x4xf32>
    %28 = vector.shape_cast %27 : vector<256x4xf32> to vector<16x16x4xf32>
    %cst_8 = arith.constant 0.000000e+00 : f32
    %29 = vector.broadcast %cst_8 : f32 to vector<16x1x4xf32>
    %cst_9 = arith.constant 0.000000e+00 : f32
    %30 = vector.broadcast %cst_9 : f32 to vector<1x18x4xf32>
    %31 = tpu.concatenate %29, %28, %29 in 1 : vector<16x1x4xf32>, vector<16x16x4xf32>, vector<16x1x4xf32> -> vector<16x18x4xf32>
    %32 = tpu.concatenate %30, %31, %30 in 0 : vector<1x18x4xf32>, vector<16x18x4xf32>, vector<1x18x4xf32> -> vector<18x18x4xf32>
    %c0_10 = arith.constant 0 : index
    %c0_11 = arith.constant 0 : index
    %33 = vector.load %arg4[%c0_10, %c0_11] : memref<36x4xf32, #tpu.memory_space<vmem>>, vector<36x4xf32>
    %c0_12 = arith.constant 0 : index
    %c0_13 = arith.constant 0 : index
    %34 = vector.load %arg5[%c0_12, %c0_13] : memref<1x4xf32, #tpu.memory_space<vmem>>, vector<1x4xf32>
    %35 = vector.extract_strided_slice %32 {offsets = [0, 0, 0], sizes = [16, 16, 4], strides = [1, 1, 1]} : vector<18x18x4xf32> to vector<16x16x4xf32>
    %36 = vector.shape_cast %35 : vector<16x16x4xf32> to vector<256x4xf32>
    %37 = vector.extract_strided_slice %32 {offsets = [0, 1, 0], sizes = [16, 16, 4], strides = [1, 1, 1]} : vector<18x18x4xf32> to vector<16x16x4xf32>
    %38 = vector.shape_cast %37 : vector<16x16x4xf32> to vector<256x4xf32>
    %39 = vector.extract_strided_slice %32 {offsets = [0, 2, 0], sizes = [16, 16, 4], strides = [1, 1, 1]} : vector<18x18x4xf32> to vector<16x16x4xf32>
    %40 = vector.shape_cast %39 : vector<16x16x4xf32> to vector<256x4xf32>
    %41 = vector.extract_strided_slice %32 {offsets = [1, 0, 0], sizes = [16, 16, 4], strides = [1, 1, 1]} : vector<18x18x4xf32> to vector<16x16x4xf32>
    %42 = vector.shape_cast %41 : vector<16x16x4xf32> to vector<256x4xf32>
    %43 = vector.extract_strided_slice %32 {offsets = [1, 1, 0], sizes = [16, 16, 4], strides = [1, 1, 1]} : vector<18x18x4xf32> to vector<16x16x4xf32>
    %44 = vector.shape_cast %43 : vector<16x16x4xf32> to vector<256x4xf32>
    %45 = vector.extract_strided_slice %32 {offsets = [1, 2, 0], sizes = [16, 16, 4], strides = [1, 1, 1]} : vector<18x18x4xf32> to vector<16x16x4xf32>
    %46 = vector.shape_cast %45 : vector<16x16x4xf32> to vector<256x4xf32>
    %47 = vector.extract_strided_slice %32 {offsets = [2, 0, 0], sizes = [16, 16, 4], strides = [1, 1, 1]} : vector<18x18x4xf32> to vector<16x16x4xf32>
    %48 = vector.shape_cast %47 : vector<16x16x4xf32> to vector<256x4xf32>
    %49 = vector.extract_strided_slice %32 {offsets = [2, 1, 0], sizes = [16, 16, 4], strides = [1, 1, 1]} : vector<18x18x4xf32> to vector<16x16x4xf32>
    %50 = vector.shape_cast %49 : vector<16x16x4xf32> to vector<256x4xf32>
    %51 = vector.extract_strided_slice %32 {offsets = [2, 2, 0], sizes = [16, 16, 4], strides = [1, 1, 1]} : vector<18x18x4xf32> to vector<16x16x4xf32>
    %52 = vector.shape_cast %51 : vector<16x16x4xf32> to vector<256x4xf32>
    %53 = tpu.concatenate %36, %38, %40, %42, %44, %46, %48, %50, %52 in 1 : vector<256x4xf32>, vector<256x4xf32>, vector<256x4xf32>, vector<256x4xf32>, vector<256x4xf32>, vector<256x4xf32>, vector<256x4xf32>, vector<256x4xf32>, vector<256x4xf32> -> vector<256x36xf32>
    %cst_14 = arith.constant dense<0.000000e+00> : vector<256x4xf32>
    %54 = tpu.matmul %53, %33, %cst_14 {dimension_numbers = #tpu.dot_dimension_numbers<[1], [0], [0], [1], [0, 0, 1, 1], [], []>} : vector<256x36xf32>, vector<36x4xf32>, vector<256x4xf32> -> vector<256x4xf32>
    %55 = vector.broadcast %34 : vector<1x4xf32> to vector<256x4xf32>
    %56 = arith.addf %54, %55 : vector<256x4xf32>
    %57 = vector.extract_strided_slice %1 {offsets = [1, 1, 0], sizes = [16, 16, 4], strides = [1, 1, 1]} : vector<18x18x4xf32> to vector<16x16x4xf32>
    %58 = vector.shape_cast %57 : vector<16x16x4xf32> to vector<256x4xf32>
    %59 = arith.addf %58, %56 : vector<256x4xf32>
    %cst_15 = arith.constant 0.000000e+00 : f32
    %60 = vector.broadcast %cst_15 : f32 to vector<256x4xf32>
    %61 = arith.maximumf %59, %60 : vector<256x4xf32>
    %62 = vector.shape_cast %61 : vector<256x4xf32> to vector<16x16x4xf32>
    %c0_16 = arith.constant 0 : index
    %c0_17 = arith.constant 0 : index
    %c0_18 = arith.constant 0 : index
    %c0_19 = arith.constant 0 : index
    %63 = vector.load %arg6[%c0_16, %c0_17, %c0_18, %c0_19] : memref<1x16x16x4xf32, #tpu.memory_space<vmem>>, vector<1x16x16x4xf32>
    %64 = vector.shape_cast %63 : vector<1x16x16x4xf32> to vector<16x16x4xf32>
    %65 = vector.shape_cast %62 : vector<16x16x4xf32> to vector<1x16x16x4xf32>
    tpu.vector_store %arg6[%c0_16, %c0_17, %c0_18, %c0_19], %65 {strides = array<i32>} : memref<1x16x16x4xf32, #tpu.memory_space<vmem>>, vector<1x16x16x4xf32>,
    return
  }
  func.func @transform_0(%arg0: i32) -> (i32, i32, i32, i32) {
    %c0_i32 = arith.constant 0 : i32
    %c0_i32_0 = arith.constant 0 : i32
    %c0_i32_1 = arith.constant 0 : i32
    %c0_i32_2 = arith.constant 0 : i32
    return %arg0, %c0_i32, %c0_i32_0, %c0_i32_1 : i32, i32, i32, i32
  }
  func.func @transform_1(%arg0: i32) -> (i32, i32) {
    %c0_i32 = arith.constant 0 : i32
    %c0_i32_0 = arith.constant 0 : i32
    %c0_i32_1 = arith.constant 0 : i32
    return %c0_i32, %c0_i32_0 : i32, i32
  }
  func.func @transform_2(%arg0: i32) -> (i32, i32) {
    %c0_i32 = arith.constant 0 : i32
    %c0_i32_0 = arith.constant 0 : i32
    %c0_i32_1 = arith.constant 0 : i32
    return %c0_i32, %c0_i32_0 : i32, i32
  }
  func.func @transform_3(%arg0: i32) -> (i32, i32) {
    %c0_i32 = arith.constant 0 : i32
    %c0_i32_0 = arith.constant 0 : i32
    %c0_i32_1 = arith.constant 0 : i32
    return %c0_i32, %c0_i32_0 : i32, i32
  }
  func.func @transform_4(%arg0: i32) -> (i32, i32) {
    %c0_i32 = arith.constant 0 : i32
    %c0_i32_0 = arith.constant 0 : i32
    %c0_i32_1 = arith.constant 0 : i32
    return %c0_i32, %c0_i32_0 : i32, i32
  }
  func.func @transform_5(%arg0: i32) -> (i32, i32, i32, i32) {
    %c0_i32 = arith.constant 0 : i32
    %c0_i32_0 = arith.constant 0 : i32
    %c0_i32_1 = arith.constant 0 : i32
    %c0_i32_2 = arith.constant 0 : i32
    return %arg0, %c0_i32, %c0_i32_0, %c0_i32_1 : i32, i32, i32, i32
  }
}

</mosaic_0001>

<llo_original>
// kernel: tpu_custom_call.1
$region0: #{tpu_custom_call.1}
  #allocation0 [shape = 'u32[]', space=smem, size = 0x4, offset = 0x4, fixed_abs, tag = 'smem constant byte address 0x4 - core index']
  #allocation1 [shape = 'u32[144,128]{1,0:T(1,128)}', space=vmem, size = 0x12000, scoped, tag = 'internal scratch']
  %s0 = inlined_call_operand.vmem [shape: f32[2,18,18,4], index: 0, kind: input, shape index: {}]
  %s1 = inlined_call_operand.vmem [shape: f32[36,4], index: 1, kind: input, shape index: {}]
  %s2 = inlined_call_operand.vmem [shape: f32[1,4], index: 2, kind: input, shape index: {}]
  %s3 = inlined_call_operand.vmem [shape: f32[36,4], index: 3, kind: input, shape index: {}]
  %s4 = inlined_call_operand.vmem [shape: f32[1,4], index: 4, kind: input, shape index: {}]
  %s5 = inlined_call_operand.vmem [shape: f32[2,16,16,4], index: 5, kind: output, shape index: {}]
  %s6 = sld [smem:[#allocation0]]
  $region53: #{tpu_custom_call.1} parent=0
    _
  %s8 = ssub.s32 1, %s6
  %s9 = scalar_select 0, %s8, %s6
  loop: start=0, step=1, limit=4
  $region2: #{tpu_custom_call.1} parent=0 // loop_pre_header
    _
  $region3: #{tpu_custom_call.1} parent=0 // loop_header
    %s11 = sphi 0, %s15
    %p12 = scmp.ge.s32.totalorder %s11, 4
    %s21 = sphi 0, %s23
    %s24 = sphi 0, %s21
    %s25 = sphi 0, %s24
    %s41 = sphi 0, %s25
    %s45 = sphi 0, %s45
    %s47 = sphi 0, %s45
    %s48 = sphi 0, %s47
    %s62 = sphi 0, %s48
    %s66 = sphi 0, %s66
    %s68 = sphi 0, %s66
    %s69 = sphi 0, %s68
    %s83 = sphi 0, %s69
    %s87 = sphi 0, %s87
    %s89 = sphi 0, %s87
    %s90 = sphi 0, %s89
    %s104 = sphi 0, %s90
    %s108 = sphi 0, %s108
    %s110 = sphi 0, %s108
    %s111 = sphi 0, %s110
    %s125 = sphi 0, %s111
    %s131 = sphi 0, %s133
    %s134 = sphi 0, %s131
    %s135 = sphi 0, %s134
    %s151 = sphi 0, %s135
  $region4: #{tpu_custom_call.1} parent=0 // loop_header_branch
    %14 = sbr.rel (%p12) target = $region8
  $region5: #{tpu_custom_call.1} parent=0 // loop_body
    %s16 = ssub.s32 %s11, 1
    %s17 = ssub.s32 %s11, 2
    %s18 = sadd.s32 %s11, 1
    %s19 = ssub.s32 %s11, %s18
    %p20 = scmp.eq.s32.totalorder %s19, 0
    %s22 = sadd.s32 %s21, 1
    %s23 = scalar_select %p20, %s21, %s22
    %p26 = pneg %p20
    %p27 = scmp.eq.s32.totalorder %s11, 1
    %p28 = por %p26, %p27
    %p29 = scmp.ne.s32.totalorder %s21, %s24
    %p30 = scmp.eq.s32.totalorder %s11, 0
    %p31 = por %p29, %p30
    %p32 = scmp.ne.s32.totalorder %s21, %s24
    %p33 = scmp.eq.s32.totalorder %s16, 1
    %p34 = por %p32, %p33
    %p35 = scmp.ne.s32.totalorder %s24, %s25
    %p36 = scmp.eq.s32.totalorder %s16, 0
    %p37 = por %p35, %p36
    %p38 = scmp.ne.s32.totalorder %s24, %s25
    %p39 = scmp.eq.s32.totalorder %s17, 1
    %p40 = por %p38, %p39
    %p42 = scmp.ne.s32.totalorder %s25, %s41
    %p43 = scmp.eq.s32.totalorder %s17, 0
    %p44 = por %p42, %p43
    %s46 = sadd.s32 %s45, 1
    %p49 = scmp.eq.s32.totalorder %s11, 1
    %p50 = scmp.ne.s32.totalorder %s45, %s47
    %p51 = scmp.eq.s32.totalorder %s11, 0
    %p52 = por %p50, %p51
    %p53 = scmp.ne.s32.totalorder %s45, %s47
    %p54 = scmp.eq.s32.totalorder %s16, 1
    %p55 = por %p53, %p54
    %p56 = scmp.ne.s32.totalorder %s47, %s48
    %p57 = scmp.eq.s32.totalorder %s16, 0
    %p58 = por %p56, %p57
    %p59 = scmp.ne.s32.totalorder %s47, %s48
    %p60 = scmp.eq.s32.totalorder %s17, 1
    %p61 = por %p59, %p60
    %p63 = scmp.ne.s32.totalorder %s48, %s62
    %p64 = scmp.eq.s32.totalorder %s17, 0
    %p65 = por %p63, %p64
    %s67 = sadd.s32 %s66, 1
    %p70 = scmp.eq.s32.totalorder %s11, 1
    %p71 = scmp.ne.s32.totalorder %s66, %s68
    %p72 = scmp.eq.s32.totalorder %s11, 0
    %p73 = por %p71, %p72
    %p74 = scmp.ne.s32.totalorder %s66, %s68
    %p75 = scmp.eq.s32.totalorder %s16, 1
    %p76 = por %p74, %p75
    %p77 = scmp.ne.s32.totalorder %s68, %s69
    %p78 = scmp.eq.s32.totalorder %s16, 0
    %p79 = por %p77, %p78
    %p80 = scmp.ne.s32.totalorder %s68, %s69
    %p81 = scmp.eq.s32.totalorder %s17, 1
    %p82 = por %p80, %p81
    %p84 = scmp.ne.s32.totalorder %s69, %s83
    %p85 = scmp.eq.s32.totalorder %s17, 0
    %p86 = por %p84, %p85
    %s88 = sadd.s32 %s87, 1
    %p91 = scmp.eq.s32.totalorder %s11, 1
    %p92 = scmp.ne.s32.totalorder %s87, %s89
    %p93 = scmp.eq.s32.totalorder %s11, 0
    %p94 = por %p92, %p93
    %p95 = scmp.ne.s32.totalorder %s87, %s89
    %p96 = scmp.eq.s32.totalorder %s16, 1
    %p97 = por %p95, %p96
    %p98 = scmp.ne.s32.totalorder %s89, %s90
    %p99 = scmp.eq.s32.totalorder %s16, 0
    %p100 = por %p98, %p99
    %p101 = scmp.ne.s32.totalorder %s89, %s90
    %p102 = scmp.eq.s32.totalorder %s17, 1
    %p103 = por %p101, %p102
    %p105 = scmp.ne.s32.totalorder %s90, %s104
    %p106 = scmp.eq.s32.totalorder %s17, 0
    %p107 = por %p105, %p106
    %s109 = sadd.s32 %s108, 1
    %p112 = scmp.eq.s32.totalorder %s11, 1
    %p113 = scmp.ne.s32.totalorder %s108, %s110
    %p114 = scmp.eq.s32.totalorder %s11, 0
    %p115 = por %p113, %p114
    %p116 = scmp.ne.s32.totalorder %s108, %s110
    %p117 = scmp.eq.s32.totalorder %s16, 1
    %p118 = por %p116, %p117
    %p119 = scmp.ne.s32.totalorder %s110, %s111
    %p120 = scmp.eq.s32.totalorder %s16, 0
    %p121 = por %p119, %p120
    %p122 = scmp.ne.s32.totalorder %s110, %s111
    %p123 = scmp.eq.s32.totalorder %s17, 1
    %p124 = por %p122, %p123
    %p126 = scmp.ne.s32.totalorder %s111, %s125
    %p127 = scmp.eq.s32.totalorder %s17, 0
    %p128 = por %p126, %p127
    %s129 = ssub.s32 %s11, %s18
    %p130 = scmp.eq.s32.totalorder %s129, 0
    %s132 = sadd.s32 %s131, 1
    %s133 = scalar_select %p130, %s131, %s132
    %p136 = pneg %p130
    %p137 = scmp.eq.s32.totalorder %s11, 1
    %p138 = por %p136, %p137
    %p139 = scmp.ne.s32.totalorder %s131, %s134
    %p140 = scmp.eq.s32.totalorder %s11, 0
    %p141 = por %p139, %p140
    %p142 = scmp.ne.s32.totalorder %s131, %s134
    %p143 = scmp.eq.s32.totalorder %s16, 1
    %p144 = por %p142, %p143
    %p145 = scmp.ne.s32.totalorder %s134, %s135
    %p146 = scmp.eq.s32.totalorder %s16, 0
    %p147 = por %p145, %p146
    %p148 = scmp.ne.s32.totalorder %s134, %s135
    %p149 = scmp.eq.s32.totalorder %s17, 1
    %p150 = por %p148, %p149
    %p152 = scmp.ne.s32.totalorder %s135, %s151
    %p153 = scmp.eq.s32.totalorder %s17, 0
    %p154 = por %p152, %p153
    %p155 = scmp.le.s32.totalorder 1, %s11
    %p156 = scmp.lt.s32.totalorder %s11, 3
    %p157 = pnand %p155, %p156
    %p158 = pneg %p157
    // Predicated region
    $region9: #{tpu_custom_call.1} parent=5 // pred_check
      _
    $region10: #{tpu_custom_call.1} parent=5 // pred_check_branch
      %160 = sbr.rel (%p157) target = $region12
    $region11: #{tpu_custom_call.1} parent=5 // pred_region
      %s161 = ssub.s32 %s11, 1
      // Predicated region
      $region13: #{tpu_custom_call.1} parent=11 // pred_check
        %p162 = pneg %p58
      $region14: #{tpu_custom_call.1} parent=11 // pred_check_branch
        %164 = sbr.rel (%p162) target = $region16
      $region15: #{tpu_custom_call.1} parent=11 // pred_region
        _
      $region16: #{tpu_custom_call.1} parent=11 // pred_fallthru
        _
      // Predicated region
      $region17: #{tpu_custom_call.1} parent=11 // pred_check
        %p165 = pneg %p79
      $region18: #{tpu_custom_call.1} parent=11 // pred_check_branch
        %167 = sbr.rel (%p165) target = $region20
      $region19: #{tpu_custom_call.1} parent=11 // pred_region
        _
      $region20: #{tpu_custom_call.1} parent=11 // pred_fallthru
        _
      // Predicated region
      $region21: #{tpu_custom_call.1} parent=11 // pred_check
        %p168 = pneg %p100
      $region22: #{tpu_custom_call.1} parent=11 // pred_check_branch
        %170 = sbr.rel (%p168) target = $region24
      $region23: #{tpu_custom_call.1} parent=11 // pred_region
        _
      $region24: #{tpu_custom_call.1} parent=11 // pred_fallthru
        _
      // Predicated region
      $region25: #{tpu_custom_call.1} parent=11 // pred_check
        %p171 = pneg %p121
      $region26: #{tpu_custom_call.1} parent=11 // pred_check_branch
        %173 = sbr.rel (%p171) target = $region28
      $region27: #{tpu_custom_call.1} parent=11 // pred_region
        _
      $region28: #{tpu_custom_call.1} parent=11 // pred_fallthru
        _
    $region12: #{tpu_custom_call.1} parent=5 // pred_fallthru
      _
    %p174 = scmp.lt.s32.totalorder %s11, 2
    // Predicated region
    $region29: #{tpu_custom_call.1} parent=5 // pred_check
      %p175 = pneg %p174
    $region30: #{tpu_custom_call.1} parent=5 // pred_check_branch
      %177 = sbr.rel (%p175) target = $region32
    $region31: #{tpu_custom_call.1} parent=5 // pred_region
      // Predicated region
      $region33: #{tpu_custom_call.1} parent=31 // pred_check
        %p178 = pneg %p31
      $region34: #{tpu_custom_call.1} parent=31 // pred_check_branch
        %180 = sbr.rel (%p178) target = $region36
      $region35: #{tpu_custom_call.1} parent=31 // pred_region
        %p181 = scmp.lt.s32.totalorder %s11, 1
        %s182 = scalar_select %p181, %s11, 1
        %s183 = smul.addr %s182, 54
        %s184 = smul.addr %s183, 8
        %s185 = scalar_lea.vmem %s0, %s184
      $region36: #{tpu_custom_call.1} parent=31 // pred_fallthru
        _
    $region32: #{tpu_custom_call.1} parent=5 // pred_fallthru
      _
    %p186 = scmp.le.s32.totalorder 1, %s11
    %p187 = scmp.lt.s32.totalorder %s11, 3
    %p188 = pnand %p186, %p187
    %p189 = pneg %p188
    // Predicated region
    $region37: #{tpu_custom_call.1} parent=5 // pred_check
      _
    $region38: #{tpu_custom_call.1} parent=5 // pred_check_branch
      %191 = sbr.rel (%p188) target = $region40
    $region39: #{tpu_custom_call.1} parent=5 // pred_region
      %s192 = ssub.s32 %s11, 1
      %p193 = scmp.lt.s32.totalorder %s16, 1
      %s194 = scalar_select %p193, %s16, 1
      %s195 = smul.addr %s194, 54
      %s196 = smul.addr %s195, 8
      %s197 = scalar_lea.vmem %s0, %s196
      %p198 = pneg %p37
      %p199 = pneg %p34
      %p200 = pneg %p58
      %p201 = pneg %p55
      %p202 = pneg %p79
      %p203 = pneg %p76
      %p204 = pneg %p100
      %p205 = pneg %p97
      %p206 = pneg %p121
      %p207 = pneg %p118
      %p208 = pneg %p147
      %p209 = pneg %p144
      %p210 = scmp.lt.s32.totalorder %s16, 1
      %s211 = scalar_select %p210, %s16, 1
      %s212 = smul.addr %s211, 32
      %s213 = smul.addr %s212, 8
      %s214 = scalar_lea.vmem %s5, %s213
      %p215 = scmp.lt.s32.totalorder %s16, 1
      %s216 = scalar_select %p215, %s16, 1
      %s217 = smul.addr %s216, 54
      %s218 = smul.addr %s217, 8
      %s219 = scalar_lea.vmem %s0, %s218
      %p220 = scmp.lt.s32.totalorder %s16, 1
      %s221 = scalar_select %p220, %s16, 1
      %s222 = smul.addr %s221, 32
      %s223 = smul.addr %s222, 8
      %s224 = scalar_lea.vmem %s5, %s223
      %v225 = vld [vmem:[%s219] sm:$0xff]
      %v226 = vld [vmem:[%s219 + $0x8] sm:$0xff]
      %v227 = vld [vmem:[%s219 + $0x10] sm:$0x3]
      %v228 = vld [vmem:[%s219 + $0x18] sm:$0xff]
      %v229 = vld [vmem:[%s219 + $0x20] sm:$0xff]
      %v230 = vld [vmem:[%s219 + $0x28] sm:$0x3]
      %v231 = vld [vmem:[%s219 + $0x30] sm:$0xff]
      %v232 = vld [vmem:[%s219 + $0x38] sm:$0xff]
      %v233 = vld [vmem:[%s219 + $0x40] sm:$0x3]
      %v234 = vld [vmem:[%s219 + $0x48] sm:$0xff]
      %v235 = vld [vmem:[%s219 + $0x50] sm:$0xff]
      %v236 = vld [vmem:[%s219 + $0x58] sm:$0x3]
      %v237 = vld [vmem:[%s219 + $0x60] sm:$0xff]
      %v238 = vld [vmem:[%s219 + $0x68] sm:$0xff]
      %v239 = vld [vmem:[%s219 + $0x70] sm:$0x3]
      %v240 = vld [vmem:[%s219 + $0x78] sm:$0xff]
      %v241 = vld [vmem:[%s219 + $0x80] sm:$0xff]
      %v242 = vld [vmem:[%s219 + $0x88] sm:$0x3]
      %v243 = vld [vmem:[%s219 + $0x90] sm:$0xff]
      %v244 = vld [vmem:[%s219 + $0x98] sm:$0xff]
      %v245 = vld [vmem:[%s219 + $0xa0] sm:$0x3]
      %v246 = vld [vmem:[%s219 + $0xa8] sm:$0xff]
      %v247 = vld [vmem:[%s219 + $0xb0] sm:$0xff]
      %v248 = vld [vmem:[%s219 + $0xb8] sm:$0x3]
      %v249 = vld [vmem:[%s219 + $0xc0] sm:$0xff]
      %v250 = vld [vmem:[%s219 + $0xc8] sm:$0xff]
      %v251 = vld [vmem:[%s219 + $0xd0] sm:$0x3]
      %v252 = vld [vmem:[%s219 + $0xd8] sm:$0xff]
      %v253 = vld [vmem:[%s219 + $0xe0] sm:$0xff]
      %v254 = vld [vmem:[%s219 + $0xe8] sm:$0x3]
      %v255 = vld [vmem:[%s219 + $0xf0] sm:$0xff]
      %v256 = vld [vmem:[%s219 + $0xf8] sm:$0xff]
      %v257 = vld [vmem:[%s219 + $0x100] sm:$0x3]
      %v258 = vld [vmem:[%s219 + $0x108] sm:$0xff]
      %v259 = vld [vmem:[%s219 + $0x110] sm:$0xff]
      %v260 = vld [vmem:[%s219 + $0x118] sm:$0x3]
      %v261 = vld [vmem:[%s219 + $0x120] sm:$0xff]
      %v262 = vld [vmem:[%s219 + $0x128] sm:$0xff]
      %v263 = vld [vmem:[%s219 + $0x130] sm:$0x3]
      %v264 = vld [vmem:[%s219 + $0x138] sm:$0xff]
      %v265 = vld [vmem:[%s219 + $0x140] sm:$0xff]
      %v266 = vld [vmem:[%s219 + $0x148] sm:$0x3]
      %v267 = vld [vmem:[%s219 + $0x150] sm:$0xff]
      %v268 = vld [vmem:[%s219 + $0x158] sm:$0xff]
      %v269 = vld [vmem:[%s219 + $0x160] sm:$0x3]
      %v270 = vld [vmem:[%s219 + $0x168] sm:$0xff]
      %v271 = vld [vmem:[%s219 + $0x170] sm:$0xff]
      %v272 = vld [vmem:[%s219 + $0x178] sm:$0x3]
      %v273 = vld [vmem:[%s219 + $0x180] sm:$0xff]
      %v274 = vld [vmem:[%s219 + $0x188] sm:$0xff]
      %v275 = vld [vmem:[%s219 + $0x190] sm:$0x3]
      %v276 = vld [vmem:[%s219 + $0x198] sm:$0xff]
      %v277 = vld [vmem:[%s219 + $0x1a0] sm:$0xff]
      %v278 = vld [vmem:[%s219 + $0x1a8] sm:$0x3]
      %v279 = vld [vmem:[%s1] sm:$0xff]
      %v280 = vld [vmem:[%s1 + $0x8] sm:$0xff]
      %v281 = vld [vmem:[%s1 + $0x10] sm:$0xff]
      %v282 = vld [vmem:[%s1 + $0x18] sm:$0xff]
      %v283 = vld [vmem:[%s1 + $0x20] sm:$0xf]
      %v284 = vld [vmem:[%s2] sm:$0x1]
      %vm333 = vcmask 1046528
      %v334 = vrot.slane %v225, 1
      %v335 = vrot.slane %v226, 1
      %v336 = vsel %vm333, %v334, %v335
      %v337 = vrot.slane %v227, 1
      %v338 = vsel %vm333, %v335, %v337
      %v339 = vrot.slane %v228, 1
      %v340 = vrot.slane %v229, 1
      %v341 = vsel %vm333, %v339, %v340
      %v342 = vrot.slane %v230, 1
      %v343 = vsel %vm333, %v340, %v342
      %v344 = vrot.slane %v231, 1
      %v345 = vrot.slane %v232, 1
      %v346 = vsel %vm333, %v344, %v345
      %v347 = vrot.slane %v233, 1
      %v348 = vsel %vm333, %v345, %v347
      %v349 = vrot.slane %v234, 1
      %v350 = vrot.slane %v235, 1
      %v351 = vsel %vm333, %v349, %v350
      %v352 = vrot.slane %v236, 1
      %v353 = vsel %vm333, %v350, %v352
      %v354 = vrot.slane %v237, 1
      %v355 = vrot.slane %v238, 1
      %v356 = vsel %vm333, %v354, %v355
      %v357 = vrot.slane %v239, 1
      %v358 = vsel %vm333, %v355, %v357
      %v359 = vrot.slane %v240, 1
      %v360 = vrot.slane %v241, 1
      %v361 = vsel %vm333, %v359, %v360
      %v362 = vrot.slane %v242, 1
      %v363 = vsel %vm333, %v360, %v362
      %v364 = vrot.slane %v243, 1
      %v365 = vrot.slane %v244, 1
      %v366 = vsel %vm333, %v364, %v365
      %v367 = vrot.slane %v245, 1
      %v368 = vsel %vm333, %v365, %v367
      %v369 = vrot.slane %v246, 1
      %v370 = vrot.slane %v247, 1
      %v371 = vsel %vm333, %v369, %v370
      %v372 = vrot.slane %v248, 1
      %v373 = vsel %vm333, %v370, %v372
      %v374 = vrot.slane %v249, 1
      %v375 = vrot.slane %v250, 1
      %v376 = vsel %vm333, %v374, %v375
      %v377 = vrot.slane %v251, 1
      %v378 = vsel %vm333, %v375, %v377
      %v379 = vrot.slane %v252, 1
      %v380 = vrot.slane %v253, 1
      %v381 = vsel %vm333, %v379, %v380
      %v382 = vrot.slane %v254, 1
      %v383 = vsel %vm333, %v380, %v382
      %v384 = vrot.slane %v255, 1
      %v385 = vrot.slane %v256, 1
      %v386 = vsel %vm333, %v384, %v385
      %v387 = vrot.slane %v257, 1
      %v388 = vsel %vm333, %v385, %v387
      %v389 = vrot.slane %v258, 1
      %v390 = vrot.slane %v259, 1
      %v391 = vsel %vm333, %v389, %v390
      %v392 = vrot.slane %v260, 1
      %v393 = vsel %vm333, %v390, %v392
      %v394 = vrot.slane %v261, 1
      %v395 = vrot.slane %v262, 1
      %v396 = vsel %vm333, %v394, %v395
      %v397 = vrot.slane %v263, 1
      %v398 = vsel %vm333, %v395, %v397
      %v399 = vrot.slane %v264, 1
      %v400 = vrot.slane %v265, 1
      %v401 = vsel %vm333, %v399, %v400
      %v402 = vrot.slane %v266, 1
      %v403 = vsel %vm333, %v400, %v402
      %v404 = vrot.slane %v267, 1
      %v405 = vrot.slane %v268, 1
      %v406 = vsel %vm333, %v404, %v405
      %v407 = vrot.slane %v269, 1
      %v408 = vsel %vm333, %v405, %v407
      %v409 = vrot.slane %v270, 1
      %v410 = vrot.slane %v271, 1
      %v411 = vsel %vm333, %v409, %v410
      %v412 = vrot.slane %v272, 1
      %v413 = vsel %vm333, %v410, %v412
      %vm414 = vcmask 1045504
      %v415 = vrot.slane %v225, 2
      %v416 = vrot.slane %v226, 2
      %v417 = vsel %vm414, %v415, %v416
      %v418 = vrot.slane %v227, 2
      %v419 = vsel %vm414, %v416, %v418
      %v420 = vrot.slane %v228, 2
      %v421 = vrot.slane %v229, 2
      %v422 = vsel %vm414, %v420, %v421
      %v423 = vrot.slane %v230, 2
      %v424 = vsel %vm414, %v421, %v423
      %v425 = vrot.slane %v231, 2
      %v426 = vrot.slane %v232, 2
      %v427 = vsel %vm414, %v425, %v426
      %v428 = vrot.slane %v233, 2
      %v429 = vsel %vm414, %v426, %v428
      %v430 = vrot.slane %v234, 2
      %v431 = vrot.slane %v235, 2
      %v432 = vsel %vm414, %v430, %v431
      %v433 = vrot.slane %v236, 2
      %v434 = vsel %vm414, %v431, %v433
      %v435 = vrot.slane %v237, 2
      %v436 = vrot.slane %v238, 2
      %v437 = vsel %vm414, %v435, %v436
      %v438 = vrot.slane %v239, 2
      %v439 = vsel %vm414, %v436, %v438
      %v440 = vrot.slane %v240, 2
      %v441 = vrot.slane %v241, 2
      %v442 = vsel %vm414, %v440, %v441
      %v443 = vrot.slane %v242, 2
      %v444 = vsel %vm414, %v441, %v443
      %v445 = vrot.slane %v243, 2
      %v446 = vrot.slane %v244, 2
      %v447 = vsel %vm414, %v445, %v446
      %v448 = vrot.slane %v245, 2
      %v449 = vsel %vm414, %v446, %v448
      %v450 = vrot.slane %v246, 2
      %v451 = vrot.slane %v247, 2
      %v452 = vsel %vm414, %v450, %v451
      %v453 = vrot.slane %v248, 2
      %v454 = vsel %vm414, %v451, %v453
      %v455 = vrot.slane %v249, 2
      %v456 = vrot.slane %v250, 2
      %v457 = vsel %vm414, %v455, %v456
      %v458 = vrot.slane %v251, 2
      %v459 = vsel %vm414, %v456, %v458
      %v460 = vrot.slane %v252, 2
      %v461 = vrot.slane %v253, 2
      %v462 = vsel %vm414, %v460, %v461
      %v463 = vrot.slane %v254, 2
      %v464 = vsel %vm414, %v461, %v463
      %v465 = vrot.slane %v255, 2
      %v466 = vrot.slane %v256, 2
      %v467 = vsel %vm414, %v465, %v466
      %v468 = vrot.slane %v257, 2
      %v469 = vsel %vm414, %v466, %v468
      %v470 = vrot.slane %v258, 2
      %v471 = vrot.slane %v259, 2
      %v472 = vsel %vm414, %v470, %v471
      %v473 = vrot.slane %v260, 2
      %v474 = vsel %vm414, %v471, %v473
      %v475 = vrot.slane %v261, 2
      %v476 = vrot.slane %v262, 2
      %v477 = vsel %vm414, %v475, %v476
      %v478 = vrot.slane %v263, 2
      %v479 = vsel %vm414, %v476, %v478
      %v480 = vrot.slane %v264, 2
      %v481 = vrot.slane %v265, 2
      %v482 = vsel %vm414, %v480, %v481
      %v483 = vrot.slane %v266, 2
      %v484 = vsel %vm414, %v481, %v483
      %v485 = vrot.slane %v267, 2
      %v486 = vrot.slane %v268, 2
      %v487 = vsel %vm414, %v485, %v486
      %v488 = vrot.slane %v269, 2
      %v489 = vsel %vm414, %v486, %v488
      %v490 = vrot.slane %v270, 2
      %v491 = vrot.slane %v271, 2
      %v492 = vsel %vm414, %v490, %v491
      %v493 = vrot.slane %v272, 2
      %v494 = vsel %vm414, %v491, %v493
      %v498 = vrot.slane %v273, 1
      %v499 = vrot.slane %v274, 1
      %v500 = vsel %vm333, %v498, %v499
      %v501 = vrot.slane %v275, 1
      %v502 = vsel %vm333, %v499, %v501
      %v535 = vrot.slane %v273, 2
      %v536 = vrot.slane %v274, 2
      %v537 = vsel %vm414, %v535, %v536
      %v538 = vrot.slane %v275, 2
      %v539 = vsel %vm414, %v536, %v538
      %v543 = vrot.slane %v276, 1
      %v544 = vrot.slane %v277, 1
      %v545 = vsel %vm333, %v543, %v544
      %v546 = vrot.slane %v278, 1
      %v547 = vsel %vm333, %v544, %v546
      %v548 = vrot.slane %v276, 2
      %v549 = vrot.slane %v277, 2
      %v550 = vsel %vm414, %v548, %v549
      %v551 = vrot.slane %v278, 2
      %v552 = vsel %vm414, %v549, %v551
      %553 = vrot.lane.b32.xlu0 %v336, 4
      %v554 = vpop.permute.xlu0 %553
      %555 = vrot.lane.b32.xlu0 %v338, 4
      %v556 = vpop.permute.xlu0 %555
      %557 = vrot.lane.b32.xlu0 %v341, 4
      %v558 = vpop.permute.xlu0 %557
      %559 = vrot.lane.b32.xlu0 %v343, 4
      %v560 = vpop.permute.xlu0 %559
      %561 = vrot.lane.b32.xlu0 %v346, 4
      %v562 = vpop.permute.xlu0 %561
      %563 = vrot.lane.b32.xlu0 %v348, 4
      %v564 = vpop.permute.xlu0 %563
      %565 = vrot.lane.b32.xlu0 %v351, 4
      %v566 = vpop.permute.xlu0 %565
      %567 = vrot.lane.b32.xlu0 %v353, 4
      %v568 = vpop.permute.xlu0 %567
      %569 = vrot.lane.b32.xlu0 %v356, 4
      %v570 = vpop.permute.xlu0 %569
      %571 = vrot.lane.b32.xlu0 %v358, 4
      %v572 = vpop.permute.xlu0 %571
      %573 = vrot.lane.b32.xlu0 %v361, 4
      %v574 = vpop.permute.xlu0 %573
      %575 = vrot.lane.b32.xlu0 %v363, 4
      %v576 = vpop.permute.xlu0 %575
      %577 = vrot.lane.b32.xlu0 %v366, 4
      %v578 = vpop.permute.xlu0 %577
      %579 = vrot.lane.b32.xlu0 %v368, 4
      %v580 = vpop.permute.xlu0 %579
      %581 = vrot.lane.b32.xlu0 %v371, 4
      %v582 = vpop.permute.xlu0 %581
      %583 = vrot.lane.b32.xlu0 %v373, 4
      %v584 = vpop.permute.xlu0 %583
      %585 = vrot.lane.b32.xlu0 %v376, 4
      %v586 = vpop.permute.xlu0 %585
      %587 = vrot.lane.b32.xlu0 %v378, 4
      %v588 = vpop.permute.xlu0 %587
      %589 = vrot.lane.b32.xlu0 %v381, 4
      %v590 = vpop.permute.xlu0 %589
      %591 = vrot.lane.b32.xlu0 %v383, 4
      %v592 = vpop.permute.xlu0 %591
      %593 = vrot.lane.b32.xlu0 %v386, 4
      %v594 = vpop.permute.xlu0 %593
      %595 = vrot.lane.b32.xlu0 %v388, 4
      %v596 = vpop.permute.xlu0 %595
      %597 = vrot.lane.b32.xlu0 %v391, 4
      %v598 = vpop.permute.xlu0 %597
      %599 = vrot.lane.b32.xlu0 %v393, 4
      %v600 = vpop.permute.xlu0 %599
      %601 = vrot.lane.b32.xlu0 %v396, 4
      %v602 = vpop.permute.xlu0 %601
      %603 = vrot.lane.b32.xlu0 %v398, 4
      %v604 = vpop.permute.xlu0 %603
      %605 = vrot.lane.b32.xlu0 %v401, 4
      %v606 = vpop.permute.xlu0 %605
      %607 = vrot.lane.b32.xlu0 %v403, 4
      %v608 = vpop.permute.xlu0 %607
      %609 = vrot.lane.b32.xlu0 %v406, 4
      %v610 = vpop.permute.xlu0 %609
      %611 = vrot.lane.b32.xlu0 %v408, 4
      %v612 = vpop.permute.xlu0 %611
      %613 = vrot.lane.b32.xlu0 %v411, 4
      %v614 = vpop.permute.xlu0 %613
      %615 = vrot.lane.b32.xlu0 %v413, 4
      %v616 = vpop.permute.xlu0 %615
      %649 = vrot.lane.b32.xlu0 %v417, 8
      %v650 = vpop.permute.xlu0 %649
      %651 = vrot.lane.b32.xlu0 %v419, 8
      %v652 = vpop.permute.xlu0 %651
      %653 = vrot.lane.b32.xlu0 %v422, 8
      %v654 = vpop.permute.xlu0 %653
      %655 = vrot.lane.b32.xlu0 %v424, 8
      %v656 = vpop.permute.xlu0 %655
      %657 = vrot.lane.b32.xlu0 %v427, 8
      %v658 = vpop.permute.xlu0 %657
      %659 = vrot.lane.b32.xlu0 %v429, 8
      %v660 = vpop.permute.xlu0 %659
      %661 = vrot.lane.b32.xlu0 %v432, 8
      %v662 = vpop.permute.xlu0 %661
      %663 = vrot.lane.b32.xlu0 %v434, 8
      %v664 = vpop.permute.xlu0 %663
      %665 = vrot.lane.b32.xlu0 %v437, 8
      %v666 = vpop.permute.xlu0 %665
      %667 = vrot.lane.b32.xlu0 %v439, 8
      %v668 = vpop.permute.xlu0 %667
      %669 = vrot.lane.b32.xlu0 %v442, 8
      %v670 = vpop.permute.xlu0 %669
      %671 = vrot.lane.b32.xlu0 %v444, 8
      %v672 = vpop.permute.xlu0 %671
      %673 = vrot.lane.b32.xlu0 %v447, 8
      %v674 = vpop.permute.xlu0 %673
      %675 = vrot.lane.b32.xlu0 %v449, 8
      %v676 = vpop.permute.xlu0 %675
      %677 = vrot.lane.b32.xlu0 %v452, 8
      %v678 = vpop.permute.xlu0 %677
      %679 = vrot.lane.b32.xlu0 %v454, 8
      %v680 = vpop.permute.xlu0 %679
      %681 = vrot.lane.b32.xlu0 %v457, 8
      %v682 = vpop.permute.xlu0 %681
      %683 = vrot.lane.b32.xlu0 %v459, 8
      %v684 = vpop.permute.xlu0 %683
      %685 = vrot.lane.b32.xlu0 %v462, 8
      %v686 = vpop.permute.xlu0 %685
      %687 = vrot.lane.b32.xlu0 %v464, 8
      %v688 = vpop.permute.xlu0 %687
      %689 = vrot.lane.b32.xlu0 %v467, 8
      %v690 = vpop.permute.xlu0 %689
      %691 = vrot.lane.b32.xlu0 %v469, 8
      %v692 = vpop.permute.xlu0 %691
      %693 = vrot.lane.b32.xlu0 %v472, 8
      %v694 = vpop.permute.xlu0 %693
      %695 = vrot.lane.b32.xlu0 %v474, 8
      %v696 = vpop.permute.xlu0 %695
      %697 = vrot.lane.b32.xlu0 %v477, 8
      %v698 = vpop.permute.xlu0 %697
      %699 = vrot.lane.b32.xlu0 %v479, 8
      %v700 = vpop.permute.xlu0 %699
      %701 = vrot.lane.b32.xlu0 %v482, 8
      %v702 = vpop.permute.xlu0 %701
      %703 = vrot.lane.b32.xlu0 %v484, 8
      %v704 = vpop.permute.xlu0 %703
      %705 = vrot.lane.b32.xlu0 %v487, 8
      %v706 = vpop.permute.xlu0 %705
      %707 = vrot.lane.b32.xlu0 %v489, 8
      %v708 = vpop.permute.xlu0 %707
      %709 = vrot.lane.b32.xlu0 %v492, 8
      %v710 = vpop.permute.xlu0 %709
      %711 = vrot.lane.b32.xlu0 %v494, 8
      %v712 = vpop.permute.xlu0 %711
      %745 = vrot.lane.b32.xlu0 %v228, 12
      %v746 = vpop.permute.xlu0 %745
      %747 = vrot.lane.b32.xlu0 %v229, 12
      %v748 = vpop.permute.xlu0 %747
      %749 = vrot.lane.b32.xlu0 %v231, 12
      %v750 = vpop.permute.xlu0 %749
      %751 = vrot.lane.b32.xlu0 %v232, 12
      %v752 = vpop.permute.xlu0 %751
      %753 = vrot.lane.b32.xlu0 %v234, 12
      %v754 = vpop.permute.xlu0 %753
      %755 = vrot.lane.b32.xlu0 %v235, 12
      %v756 = vpop.permute.xlu0 %755
      %757 = vrot.lane.b32.xlu0 %v237, 12
      %v758 = vpop.permute.xlu0 %757
      %759 = vrot.lane.b32.xlu0 %v238, 12
      %v760 = vpop.permute.xlu0 %759
      %761 = vrot.lane.b32.xlu0 %v240, 12
      %v762 = vpop.permute.xlu0 %761
      %763 = vrot.lane.b32.xlu0 %v241, 12
      %v764 = vpop.permute.xlu0 %763
      %765 = vrot.lane.b32.xlu0 %v243, 12
      %v766 = vpop.permute.xlu0 %765
      %767 = vrot.lane.b32.xlu0 %v244, 12
      %v768 = vpop.permute.xlu0 %767
      %769 = vrot.lane.b32.xlu0 %v246, 12
      %v770 = vpop.permute.xlu0 %769
      %771 = vrot.lane.b32.xlu0 %v247, 12
      %v772 = vpop.permute.xlu0 %771
      %773 = vrot.lane.b32.xlu0 %v249, 12
      %v774 = vpop.permute.xlu0 %773
      %775 = vrot.lane.b32.xlu0 %v250, 12
      %v776 = vpop.permute.xlu0 %775
      %777 = vrot.lane.b32.xlu0 %v252, 12
      %v778 = vpop.permute.xlu0 %777
      %779 = vrot.lane.b32.xlu0 %v253, 12
      %v780 = vpop.permute.xlu0 %779
      %781 = vrot.lane.b32.xlu0 %v255, 12
      %v782 = vpop.permute.xlu0 %781
      %783 = vrot.lane.b32.xlu0 %v256, 12
      %v784 = vpop.permute.xlu0 %783
      %785 = vrot.lane.b32.xlu0 %v258, 12
      %v786 = vpop.permute.xlu0 %785
      %787 = vrot.lane.b32.xlu0 %v259, 12
      %v788 = vpop.permute.xlu0 %787
      %789 = vrot.lane.b32.xlu0 %v261, 12
      %v790 = vpop.permute.xlu0 %789
      %791 = vrot.lane.b32.xlu0 %v262, 12
      %v792 = vpop.permute.xlu0 %791
      %793 = vrot.lane.b32.xlu0 %v264, 12
      %v794 = vpop.permute.xlu0 %793
      %795 = vrot.lane.b32.xlu0 %v265, 12
      %v796 = vpop.permute.xlu0 %795
      %797 = vrot.lane.b32.xlu0 %v267, 12
      %v798 = vpop.permute.xlu0 %797
      %799 = vrot.lane.b32.xlu0 %v268, 12
      %v800 = vpop.permute.xlu0 %799
      %801 = vrot.lane.b32.xlu0 %v270, 12
      %v802 = vpop.permute.xlu0 %801
      %803 = vrot.lane.b32.xlu0 %v271, 12
      %v804 = vpop.permute.xlu0 %803
      %805 = vrot.lane.b32.xlu0 %v273, 12
      %v806 = vpop.permute.xlu0 %805
      %807 = vrot.lane.b32.xlu0 %v274, 12
      %v808 = vpop.permute.xlu0 %807
      %841 = vrot.lane.b32.xlu0 %v341, 16
      %v842 = vpop.permute.xlu0 %841
      %843 = vrot.lane.b32.xlu0 %v343, 16
      %v844 = vpop.permute.xlu0 %843
      %845 = vrot.lane.b32.xlu0 %v346, 16
      %v846 = vpop.permute.xlu0 %845
      %847 = vrot.lane.b32.xlu0 %v348, 16
      %v848 = vpop.permute.xlu0 %847
      %849 = vrot.lane.b32.xlu0 %v351, 16
      %v850 = vpop.permute.xlu0 %849
      %851 = vrot.lane.b32.xlu0 %v353, 16
      %v852 = vpop.permute.xlu0 %851
      %853 = vrot.lane.b32.xlu0 %v356, 16
      %v854 = vpop.permute.xlu0 %853
      %855 = vrot.lane.b32.xlu0 %v358, 16
      %v856 = vpop.permute.xlu0 %855
      %857 = vrot.lane.b32.xlu0 %v361, 16
      %v858 = vpop.permute.xlu0 %857
      %859 = vrot.lane.b32.xlu0 %v363, 16
      %v860 = vpop.permute.xlu0 %859
      %861 = vrot.lane.b32.xlu0 %v366, 16
      %v862 = vpop.permute.xlu0 %861
      %863 = vrot.lane.b32.xlu0 %v368, 16
      %v864 = vpop.permute.xlu0 %863
      %865 = vrot.lane.b32.xlu0 %v371, 16
      %v866 = vpop.permute.xlu0 %865
      %867 = vrot.lane.b32.xlu0 %v373, 16
      %v868 = vpop.permute.xlu0 %867
      %869 = vrot.lane.b32.xlu0 %v376, 16
      %v870 = vpop.permute.xlu0 %869
      %871 = vrot.lane.b32.xlu0 %v378, 16
      %v872 = vpop.permute.xlu0 %871
      %873 = vrot.lane.b32.xlu0 %v381, 16
      %v874 = vpop.permute.xlu0 %873
      %875 = vrot.lane.b32.xlu0 %v383, 16
      %v876 = vpop.permute.xlu0 %875
      %877 = vrot.lane.b32.xlu0 %v386, 16
      %v878 = vpop.permute.xlu0 %877
      %879 = vrot.lane.b32.xlu0 %v388, 16
      %v880 = vpop.permute.xlu0 %879
      %881 = vrot.lane.b32.xlu0 %v391, 16
      %v882 = vpop.permute.xlu0 %881
      %883 = vrot.lane.b32.xlu0 %v393, 16
      %v884 = vpop.permute.xlu0 %883
      %885 = vrot.lane.b32.xlu0 %v396, 16
      %v886 = vpop.permute.xlu0 %885
      %887 = vrot.lane.b32.xlu0 %v398, 16
      %v888 = vpop.permute.xlu0 %887
      %889 = vrot.lane.b32.xlu0 %v401, 16
      %v890 = vpop.permute.xlu0 %889
      %891 = vrot.lane.b32.xlu0 %v403, 16
      %v892 = vpop.permute.xlu0 %891
      %893 = vrot.lane.b32.xlu0 %v406, 16
      %v894 = vpop.permute.xlu0 %893
      %895 = vrot.lane.b32.xlu0 %v408, 16
      %v896 = vpop.permute.xlu0 %895
      %897 = vrot.lane.b32.xlu0 %v411, 16
      %v898 = vpop.permute.xlu0 %897
      %899 = vrot.lane.b32.xlu0 %v413, 16
      %v900 = vpop.permute.xlu0 %899
      %901 = vrot.lane.b32.xlu0 %v500, 16
      %v902 = vpop.permute.xlu0 %901
      %903 = vrot.lane.b32.xlu0 %v502, 16
      %v904 = vpop.permute.xlu0 %903
      %937 = vrot.lane.b32.xlu0 %v422, 20
      %v938 = vpop.permute.xlu0 %937
      %939 = vrot.lane.b32.xlu0 %v424, 20
      %v940 = vpop.permute.xlu0 %939
      %941 = vrot.lane.b32.xlu0 %v427, 20
      %v942 = vpop.permute.xlu0 %941
      %943 = vrot.lane.b32.xlu0 %v429, 20
      %v944 = vpop.permute.xlu0 %943
      %945 = vrot.lane.b32.xlu0 %v432, 20
      %v946 = vpop.permute.xlu0 %945
      %947 = vrot.lane.b32.xlu0 %v434, 20
      %v948 = vpop.permute.xlu0 %947
      %949 = vrot.lane.b32.xlu0 %v437, 20
      %v950 = vpop.permute.xlu0 %949
      %951 = vrot.lane.b32.xlu0 %v439, 20
      %v952 = vpop.permute.xlu0 %951
      %953 = vrot.lane.b32.xlu0 %v442, 20
      %v954 = vpop.permute.xlu0 %953
      %955 = vrot.lane.b32.xlu0 %v444, 20
      %v956 = vpop.permute.xlu0 %955
      %957 = vrot.lane.b32.xlu0 %v447, 20
      %v958 = vpop.permute.xlu0 %957
      %959 = vrot.lane.b32.xlu0 %v449, 20
      %v960 = vpop.permute.xlu0 %959
      %961 = vrot.lane.b32.xlu0 %v452, 20
      %v962 = vpop.permute.xlu0 %961
      %963 = vrot.lane.b32.xlu0 %v454, 20
      %v964 = vpop.permute.xlu0 %963
      %965 = vrot.lane.b32.xlu0 %v457, 20
      %v966 = vpop.permute.xlu0 %965
      %967 = vrot.lane.b32.xlu0 %v459, 20
      %v968 = vpop.permute.xlu0 %967
      %969 = vrot.lane.b32.xlu0 %v462, 20
      %v970 = vpop.permute.xlu0 %969
      %971 = vrot.lane.b32.xlu0 %v464, 20
      %v972 = vpop.permute.xlu0 %971
      %973 = vrot.lane.b32.xlu0 %v467, 20
      %v974 = vpop.permute.xlu0 %973
      %975 = vrot.lane.b32.xlu0 %v469, 20
      %v976 = vpop.permute.xlu0 %975
      %977 = vrot.lane.b32.xlu0 %v472, 20
      %v978 = vpop.permute.xlu0 %977
      %979 = vrot.lane.b32.xlu0 %v474, 20
      %v980 = vpop.permute.xlu0 %979
      %981 = vrot.lane.b32.xlu0 %v477, 20
      %v982 = vpop.permute.xlu0 %981
      %983 = vrot.lane.b32.xlu0 %v479, 20
      %v984 = vpop.permute.xlu0 %983
      %985 = vrot.lane.b32.xlu0 %v482, 20
      %v986 = vpop.permute.xlu0 %985
      %987 = vrot.lane.b32.xlu0 %v484, 20
      %v988 = vpop.permute.xlu0 %987
      %989 = vrot.lane.b32.xlu0 %v487, 20
      %v990 = vpop.permute.xlu0 %989
      %991 = vrot.lane.b32.xlu0 %v489, 20
      %v992 = vpop.permute.xlu0 %991
      %993 = vrot.lane.b32.xlu0 %v492, 20
      %v994 = vpop.permute.xlu0 %993
      %995 = vrot.lane.b32.xlu0 %v494, 20
      %v996 = vpop.permute.xlu0 %995
      %997 = vrot.lane.b32.xlu0 %v537, 20
      %v998 = vpop.permute.xlu0 %997
      %999 = vrot.lane.b32.xlu0 %v539, 20
      %v1000 = vpop.permute.xlu0 %999
      %1033 = vrot.lane.b32.xlu0 %v231, 24
      %v1034 = vpop.permute.xlu0 %1033
      %1035 = vrot.lane.b32.xlu0 %v232, 24
      %v1036 = vpop.permute.xlu0 %1035
      %1037 = vrot.lane.b32.xlu0 %v234, 24
      %v1038 = vpop.permute.xlu0 %1037
      %1039 = vrot.lane.b32.xlu0 %v235, 24
      %v1040 = vpop.permute.xlu0 %1039
      %1041 = vrot.lane.b32.xlu0 %v237, 24
      %v1042 = vpop.permute.xlu0 %1041
      %1043 = vrot.lane.b32.xlu0 %v238, 24
      %v1044 = vpop.permute.xlu0 %1043
      %1045 = vrot.lane.b32.xlu0 %v240, 24
      %v1046 = vpop.permute.xlu0 %1045
      %1047 = vrot.lane.b32.xlu0 %v241, 24
      %v1048 = vpop.permute.xlu0 %1047
      %1049 = vrot.lane.b32.xlu0 %v243, 24
      %v1050 = vpop.permute.xlu0 %1049
      %1051 = vrot.lane.b32.xlu0 %v244, 24
      %v1052 = vpop.permute.xlu0 %1051
      %1053 = vrot.lane.b32.xlu0 %v246, 24
      %v1054 = vpop.permute.xlu0 %1053
      %1055 = vrot.lane.b32.xlu0 %v247, 24
      %v1056 = vpop.permute.xlu0 %1055
      %1057 = vrot.lane.b32.xlu0 %v249, 24
      %v1058 = vpop.permute.xlu0 %1057
      %1059 = vrot.lane.b32.xlu0 %v250, 24
      %v1060 = vpop.permute.xlu0 %1059
      %1061 = vrot.lane.b32.xlu0 %v252, 24
      %v1062 = vpop.permute.xlu0 %1061
      %1063 = vrot.lane.b32.xlu0 %v253, 24
      %v1064 = vpop.permute.xlu0 %1063
      %1065 = vrot.lane.b32.xlu0 %v255, 24
      %v1066 = vpop.permute.xlu0 %1065
      %1067 = vrot.lane.b32.xlu0 %v256, 24
      %v1068 = vpop.permute.xlu0 %1067
      %1069 = vrot.lane.b32.xlu0 %v258, 24
      %v1070 = vpop.permute.xlu0 %1069
      %1071 = vrot.lane.b32.xlu0 %v259, 24
      %v1072 = vpop.permute.xlu0 %1071
      %1073 = vrot.lane.b32.xlu0 %v261, 24
      %v1074 = vpop.permute.xlu0 %1073
      %1075 = vrot.lane.b32.xlu0 %v262, 24
      %v1076 = vpop.permute.xlu0 %1075
      %1077 = vrot.lane.b32.xlu0 %v264, 24
      %v1078 = vpop.permute.xlu0 %1077
      %1079 = vrot.lane.b32.xlu0 %v265, 24
      %v1080 = vpop.permute.xlu0 %1079
      %1081 = vrot.lane.b32.xlu0 %v267, 24
      %v1082 = vpop.permute.xlu0 %1081
      %1083 = vrot.lane.b32.xlu0 %v268, 24
      %v1084 = vpop.permute.xlu0 %1083
      %1085 = vrot.lane.b32.xlu0 %v270, 24
      %v1086 = vpop.permute.xlu0 %1085
      %1087 = vrot.lane.b32.xlu0 %v271, 24
      %v1088 = vpop.permute.xlu0 %1087
      %1089 = vrot.lane.b32.xlu0 %v273, 24
      %v1090 = vpop.permute.xlu0 %1089
      %1091 = vrot.lane.b32.xlu0 %v274, 24
      %v1092 = vpop.permute.xlu0 %1091
      %1093 = vrot.lane.b32.xlu0 %v276, 24
      %v1094 = vpop.permute.xlu0 %1093
      %1095 = vrot.lane.b32.xlu0 %v277, 24
      %v1096 = vpop.permute.xlu0 %1095
      %1129 = vrot.lane.b32.xlu0 %v346, 28
      %v1130 = vpop.permute.xlu0 %1129
      %1131 = vrot.lane.b32.xlu0 %v348, 28
      %v1132 = vpop.permute.xlu0 %1131
      %1133 = vrot.lane.b32.xlu0 %v351, 28
      %v1134 = vpop.permute.xlu0 %1133
      %1135 = vrot.lane.b32.xlu0 %v353, 28
      %v1136 = vpop.permute.xlu0 %1135
      %1137 = vrot.lane.b32.xlu0 %v356, 28
      %v1138 = vpop.permute.xlu0 %1137
      %1139 = vrot.lane.b32.xlu0 %v358, 28
      %v1140 = vpop.permute.xlu0 %1139
      %1141 = vrot.lane.b32.xlu0 %v361, 28
      %v1142 = vpop.permute.xlu0 %1141
      %1143 = vrot.lane.b32.xlu0 %v363, 28
      %v1144 = vpop.permute.xlu0 %1143
      %1145 = vrot.lane.b32.xlu0 %v366, 28
      %v1146 = vpop.permute.xlu0 %1145
      %1147 = vrot.lane.b32.xlu0 %v368, 28
      %v1148 = vpop.permute.xlu0 %1147
      %1149 = vrot.lane.b32.xlu0 %v371, 28
      %v1150 = vpop.permute.xlu0 %1149
      %1151 = vrot.lane.b32.xlu0 %v373, 28
      %v1152 = vpop.permute.xlu0 %1151
      %1153 = vrot.lane.b32.xlu0 %v376, 28
      %v1154 = vpop.permute.xlu0 %1153
      %1155 = vrot.lane.b32.xlu0 %v378, 28
      %v1156 = vpop.permute.xlu0 %1155
      %1157 = vrot.lane.b32.xlu0 %v381, 28
      %v1158 = vpop.permute.xlu0 %1157
      %1159 = vrot.lane.b32.xlu0 %v383, 28
      %v1160 = vpop.permute.xlu0 %1159
      %1161 = vrot.lane.b32.xlu0 %v386, 28
      %v1162 = vpop.permute.xlu0 %1161
      %1163 = vrot.lane.b32.xlu0 %v388, 28
      %v1164 = vpop.permute.xlu0 %1163
      %1165 = vrot.lane.b32.xlu0 %v391, 28
      %v1166 = vpop.permute.xlu0 %1165
      %1167 = vrot.lane.b32.xlu0 %v393, 28
      %v1168 = vpop.permute.xlu0 %1167
      %1169 = vrot.lane.b32.xlu0 %v396, 28
      %v1170 = vpop.permute.xlu0 %1169
      %1171 = vrot.lane.b32.xlu0 %v398, 28
      %v1172 = vpop.permute.xlu0 %1171
      %1173 = vrot.lane.b32.xlu0 %v401, 28
      %v1174 = vpop.permute.xlu0 %1173
      %1175 = vrot.lane.b32.xlu0 %v403, 28
      %v1176 = vpop.permute.xlu0 %1175
      %1177 = vrot.lane.b32.xlu0 %v406, 28
      %v1178 = vpop.permute.xlu0 %1177
      %1179 = vrot.lane.b32.xlu0 %v408, 28
      %v1180 = vpop.permute.xlu0 %1179
      %1181 = vrot.lane.b32.xlu0 %v411, 28
      %v1182 = vpop.permute.xlu0 %1181
      %1183 = vrot.lane.b32.xlu0 %v413, 28
      %v1184 = vpop.permute.xlu0 %1183
      %1185 = vrot.lane.b32.xlu0 %v500, 28
      %v1186 = vpop.permute.xlu0 %1185
      %1187 = vrot.lane.b32.xlu0 %v502, 28
      %v1188 = vpop.permute.xlu0 %1187
      %1189 = vrot.lane.b32.xlu0 %v545, 28
      %v1190 = vpop.permute.xlu0 %1189
      %1191 = vrot.lane.b32.xlu0 %v547, 28
      %v1192 = vpop.permute.xlu0 %1191
      %1225 = vrot.lane.b32.xlu0 %v427, 32
      %v1226 = vpop.permute.xlu0 %1225
      %1227 = vrot.lane.b32.xlu0 %v429, 32
      %v1228 = vpop.permute.xlu0 %1227
      %1229 = vrot.lane.b32.xlu0 %v432, 32
      %v1230 = vpop.permute.xlu0 %1229
      %1231 = vrot.lane.b32.xlu0 %v434, 32
      %v1232 = vpop.permute.xlu0 %1231
      %1233 = vrot.lane.b32.xlu0 %v437, 32
      %v1234 = vpop.permute.xlu0 %1233
      %1235 = vrot.lane.b32.xlu0 %v439, 32
      %v1236 = vpop.permute.xlu0 %1235
      %1237 = vrot.lane.b32.xlu0 %v442, 32
      %v1238 = vpop.permute.xlu0 %1237
      %1239 = vrot.lane.b32.xlu0 %v444, 32
      %v1240 = vpop.permute.xlu0 %1239
      %1241 = vrot.lane.b32.xlu0 %v447, 32
      %v1242 = vpop.permute.xlu0 %1241
      %1243 = vrot.lane.b32.xlu0 %v449, 32
      %v1244 = vpop.permute.xlu0 %1243
      %1245 = vrot.lane.b32.xlu0 %v452, 32
      %v1246 = vpop.permute.xlu0 %1245
      %1247 = vrot.lane.b32.xlu0 %v454, 32
      %v1248 = vpop.permute.xlu0 %1247
      %1249 = vrot.lane.b32.xlu0 %v457, 32
      %v1250 = vpop.permute.xlu0 %1249
      %1251 = vrot.lane.b32.xlu0 %v459, 32
      %v1252 = vpop.permute.xlu0 %1251
      %1253 = vrot.lane.b32.xlu0 %v462, 32
      %v1254 = vpop.permute.xlu0 %1253
      %1255 = vrot.lane.b32.xlu0 %v464, 32
      %v1256 = vpop.permute.xlu0 %1255
      %1257 = vrot.lane.b32.xlu0 %v467, 32
      %v1258 = vpop.permute.xlu0 %1257
      %1259 = vrot.lane.b32.xlu0 %v469, 32
      %v1260 = vpop.permute.xlu0 %1259
      %1261 = vrot.lane.b32.xlu0 %v472, 32
      %v1262 = vpop.permute.xlu0 %1261
      %1263 = vrot.lane.b32.xlu0 %v474, 32
      %v1264 = vpop.permute.xlu0 %1263
      %1265 = vrot.lane.b32.xlu0 %v477, 32
      %v1266 = vpop.permute.xlu0 %1265
      %1267 = vrot.lane.b32.xlu0 %v479, 32
      %v1268 = vpop.permute.xlu0 %1267
      %1269 = vrot.lane.b32.xlu0 %v482, 32
      %v1270 = vpop.permute.xlu0 %1269
      %1271 = vrot.lane.b32.xlu0 %v484, 32
      %v1272 = vpop.permute.xlu0 %1271
      %1273 = vrot.lane.b32.xlu0 %v487, 32
      %v1274 = vpop.permute.xlu0 %1273
      %1275 = vrot.lane.b32.xlu0 %v489, 32
      %v1276 = vpop.permute.xlu0 %1275
      %1277 = vrot.lane.b32.xlu0 %v492, 32
      %v1278 = vpop.permute.xlu0 %1277
      %1279 = vrot.lane.b32.xlu0 %v494, 32
      %v1280 = vpop.permute.xlu0 %1279
      %1281 = vrot.lane.b32.xlu0 %v537, 32
      %v1282 = vpop.permute.xlu0 %1281
      %1283 = vrot.lane.b32.xlu0 %v539, 32
      %v1284 = vpop.permute.xlu0 %1283
      %1285 = vrot.lane.b32.xlu0 %v550, 32
      %v1286 = vpop.permute.xlu0 %1285
      %1287 = vrot.lane.b32.xlu0 %v552, 32
      %v1288 = vpop.permute.xlu0 %1287
      %vm1321 = vcmask 31744
      %v1322 = vsel %vm1321, %v225, %v554
      %v1323 = vsel %vm1321, %v226, %v556
      %v1324 = vsel %vm1321, %v228, %v558
      %v1325 = vsel %vm1321, %v229, %v560
      %v1326 = vsel %vm1321, %v231, %v562
      %v1327 = vsel %vm1321, %v232, %v564
      %v1328 = vsel %vm1321, %v234, %v566
      %v1329 = vsel %vm1321, %v235, %v568
      %v1330 = vsel %vm1321, %v237, %v570
      %v1331 = vsel %vm1321, %v238, %v572
      %v1332 = vsel %vm1321, %v240, %v574
      %v1333 = vsel %vm1321, %v241, %v576
      %v1334 = vsel %vm1321, %v243, %v578
      %v1335 = vsel %vm1321, %v244, %v580
      %v1336 = vsel %vm1321, %v246, %v582
      %v1337 = vsel %vm1321, %v247, %v584
      %v1338 = vsel %vm1321, %v249, %v586
      %v1339 = vsel %vm1321, %v250, %v588
      %v1340 = vsel %vm1321, %v252, %v590
      %v1341 = vsel %vm1321, %v253, %v592
      %v1342 = vsel %vm1321, %v255, %v594
      %v1343 = vsel %vm1321, %v256, %v596
      %v1344 = vsel %vm1321, %v258, %v598
      %v1345 = vsel %vm1321, %v259, %v600
      %v1346 = vsel %vm1321, %v261, %v602
      %v1347 = vsel %vm1321, %v262, %v604
      %v1348 = vsel %vm1321, %v264, %v606
      %v1349 = vsel %vm1321, %v265, %v608
      %v1350 = vsel %vm1321, %v267, %v610
      %v1351 = vsel %vm1321, %v268, %v612
      %v1352 = vsel %vm1321, %v270, %v614
      %v1353 = vsel %vm1321, %v271, %v616
      %vm1354 = vcmask 64512
      %v1355 = vsel %vm1354, %v1322, %v650
      %v1356 = vsel %vm1354, %v1323, %v652
      %v1357 = vsel %vm1354, %v1324, %v654
      %v1358 = vsel %vm1354, %v1325, %v656
      %v1359 = vsel %vm1354, %v1326, %v658
      %v1360 = vsel %vm1354, %v1327, %v660
      %v1361 = vsel %vm1354, %v1328, %v662
      %v1362 = vsel %vm1354, %v1329, %v664
      %v1363 = vsel %vm1354, %v1330, %v666
      %v1364 = vsel %vm1354, %v1331, %v668
      %v1365 = vsel %vm1354, %v1332, %v670
      %v1366 = vsel %vm1354, %v1333, %v672
      %v1367 = vsel %vm1354, %v1334, %v674
      %v1368 = vsel %vm1354, %v1335, %v676
      %v1369 = vsel %vm1354, %v1336, %v678
      %v1370 = vsel %vm1354, %v1337, %v680
      %v1371 = vsel %vm1354, %v1338, %v682
      %v1372 = vsel %vm1354, %v1339, %v684
      %v1373 = vsel %vm1354, %v1340, %v686
      %v1374 = vsel %vm1354, %v1341, %v688
      %v1375 = vsel %vm1354, %v1342, %v690
      %v1376 = vsel %vm1354, %v1343, %v692
      %v1377 = vsel %vm1354, %v1344, %v694
      %v1378 = vsel %vm1354, %v1345, %v696
      %v1379 = vsel %vm1354, %v1346, %v698
      %v1380 = vsel %vm1354, %v1347, %v700
      %v1381 = vsel %vm1354, %v1348, %v702
      %v1382 = vsel %vm1354, %v1349, %v704
      %v1383 = vsel %vm1354, %v1350, %v706
      %v1384 = vsel %vm1354, %v1351, %v708
      %v1385 = vsel %vm1354, %v1352, %v710
      %v1386 = vsel %vm1354, %v1353, %v712
      %vm1387 = vcmask 97280
      %v1388 = vsel %vm1387, %v1355, %v746
      %v1389 = vsel %vm1387, %v1356, %v748
      %v1390 = vsel %vm1387, %v1357, %v750
      %v1391 = vsel %vm1387, %v1358, %v752
      %v1392 = vsel %vm1387, %v1359, %v754
      %v1393 = vsel %vm1387, %v1360, %v756
      %v1394 = vsel %vm1387, %v1361, %v758
      %v1395 = vsel %vm1387, %v1362, %v760
      %v1396 = vsel %vm1387, %v1363, %v762
      %v1397 = vsel %vm1387, %v1364, %v764
      %v1398 = vsel %vm1387, %v1365, %v766
      %v1399 = vsel %vm1387, %v1366, %v768
      %v1400 = vsel %vm1387, %v1367, %v770
      %v1401 = vsel %vm1387, %v1368, %v772
      %v1402 = vsel %vm1387, %v1369, %v774
      %v1403 = vsel %vm1387, %v1370, %v776
      %v1404 = vsel %vm1387, %v1371, %v778
      %v1405 = vsel %vm1387, %v1372, %v780
      %v1406 = vsel %vm1387, %v1373, %v782
      %v1407 = vsel %vm1387, %v1374, %v784
      %v1408 = vsel %vm1387, %v1375, %v786
      %v1409 = vsel %vm1387, %v1376, %v788
      %v1410 = vsel %vm1387, %v1377, %v790
      %v1411 = vsel %vm1387, %v1378, %v792
      %v1412 = vsel %vm1387, %v1379, %v794
      %v1413 = vsel %vm1387, %v1380, %v796
      %v1414 = vsel %vm1387, %v1381, %v798
      %v1415 = vsel %vm1387, %v1382, %v800
      %v1416 = vsel %vm1387, %v1383, %v802
      %v1417 = vsel %vm1387, %v1384, %v804
      %v1418 = vsel %vm1387, %v1385, %v806
      %v1419 = vsel %vm1387, %v1386, %v808
      %vm1420 = vcmask 130048
      %v1421 = vsel %vm1420, %v1388, %v842
      %v1422 = vsel %vm1420, %v1389, %v844
      %v1423 = vsel %vm1420, %v1390, %v846
      %v1424 = vsel %vm1420, %v1391, %v848
      %v1425 = vsel %vm1420, %v1392, %v850
      %v1426 = vsel %vm1420, %v1393, %v852
      %v1427 = vsel %vm1420, %v1394, %v854
      %v1428 = vsel %vm1420, %v1395, %v856
      %v1429 = vsel %vm1420, %v1396, %v858
      %v1430 = vsel %vm1420, %v1397, %v860
      %v1431 = vsel %vm1420, %v1398, %v862
      %v1432 = vsel %vm1420, %v1399, %v864
      %v1433 = vsel %vm1420, %v1400, %v866
      %v1434 = vsel %vm1420, %v1401, %v868
      %v1435 = vsel %vm1420, %v1402, %v870
      %v1436 = vsel %vm1420, %v1403, %v872
      %v1437 = vsel %vm1420, %v1404, %v874
      %v1438 = vsel %vm1420, %v1405, %v876
      %v1439 = vsel %vm1420, %v1406, %v878
      %v1440 = vsel %vm1420, %v1407, %v880
      %v1441 = vsel %vm1420, %v1408, %v882
      %v1442 = vsel %vm1420, %v1409, %v884
      %v1443 = vsel %vm1420, %v1410, %v886
      %v1444 = vsel %vm1420, %v1411, %v888
      %v1445 = vsel %vm1420, %v1412, %v890
      %v1446 = vsel %vm1420, %v1413, %v892
      %v1447 = vsel %vm1420, %v1414, %v894
      %v1448 = vsel %vm1420, %v1415, %v896
      %v1449 = vsel %vm1420, %v1416, %v898
      %v1450 = vsel %vm1420, %v1417, %v900
      %v1451 = vsel %vm1420, %v1418, %v902
      %v1452 = vsel %vm1420, %v1419, %v904
      %vm1453 = vcmask 162816
      %v1454 = vsel %vm1453, %v1421, %v938
      %v1455 = vsel %vm1453, %v1422, %v940
      %v1456 = vsel %vm1453, %v1423, %v942
      %v1457 = vsel %vm1453, %v1424, %v944
      %v1458 = vsel %vm1453, %v1425, %v946
      %v1459 = vsel %vm1453, %v1426, %v948
      %v1460 = vsel %vm1453, %v1427, %v950
      %v1461 = vsel %vm1453, %v1428, %v952
      %v1462 = vsel %vm1453, %v1429, %v954
      %v1463 = vsel %vm1453, %v1430, %v956
      %v1464 = vsel %vm1453, %v1431, %v958
      %v1465 = vsel %vm1453, %v1432, %v960
      %v1466 = vsel %vm1453, %v1433, %v962
      %v1467 = vsel %vm1453, %v1434, %v964
      %v1468 = vsel %vm1453, %v1435, %v966
      %v1469 = vsel %vm1453, %v1436, %v968
      %v1470 = vsel %vm1453, %v1437, %v970
      %v1471 = vsel %vm1453, %v1438, %v972
      %v1472 = vsel %vm1453, %v1439, %v974
      %v1473 = vsel %vm1453, %v1440, %v976
      %v1474 = vsel %vm1453, %v1441, %v978
      %v1475 = vsel %vm1453, %v1442, %v980
      %v1476 = vsel %vm1453, %v1443, %v982
      %v1477 = vsel %vm1453, %v1444, %v984
      %v1478 = vsel %vm1453, %v1445, %v986
      %v1479 = vsel %vm1453, %v1446, %v988
      %v1480 = vsel %vm1453, %v1447, %v990
      %v1481 = vsel %vm1453, %v1448, %v992
      %v1482 = vsel %vm1453, %v1449, %v994
      %v1483 = vsel %vm1453, %v1450, %v996
      %v1484 = vsel %vm1453, %v1451, %v998
      %v1485 = vsel %vm1453, %v1452, %v1000
      %vm1486 = vcmask 195584
      %v1487 = vsel %vm1486, %v1454, %v1034
      %v1488 = vsel %vm1486, %v1455, %v1036
      %v1489 = vsel %vm1486, %v1456, %v1038
      %v1490 = vsel %vm1486, %v1457, %v1040
      %v1491 = vsel %vm1486, %v1458, %v1042
      %v1492 = vsel %vm1486, %v1459, %v1044
      %v1493 = vsel %vm1486, %v1460, %v1046
      %v1494 = vsel %vm1486, %v1461, %v1048
      %v1495 = vsel %vm1486, %v1462, %v1050
      %v1496 = vsel %vm1486, %v1463, %v1052
      %v1497 = vsel %vm1486, %v1464, %v1054
      %v1498 = vsel %vm1486, %v1465, %v1056
      %v1499 = vsel %vm1486, %v1466, %v1058
      %v1500 = vsel %vm1486, %v1467, %v1060
      %v1501 = vsel %vm1486, %v1468, %v1062
      %v1502 = vsel %vm1486, %v1469, %v1064
      %v1503 = vsel %vm1486, %v1470, %v1066
      %v1504 = vsel %vm1486, %v1471, %v1068
      %v1505 = vsel %vm1486, %v1472, %v1070
      %v1506 = vsel %vm1486, %v1473, %v1072
      %v1507 = vsel %vm1486, %v1474, %v1074
      %v1508 = vsel %vm1486, %v1475, %v1076
      %v1509 = vsel %vm1486, %v1476, %v1078
      %v1510 = vsel %vm1486, %v1477, %v1080
      %v1511 = vsel %vm1486, %v1478, %v1082
      %v1512 = vsel %vm1486, %v1479, %v1084
      %v1513 = vsel %vm1486, %v1480, %v1086
      %v1514 = vsel %vm1486, %v1481, %v1088
      %v1515 = vsel %vm1486, %v1482, %v1090
      %v1516 = vsel %vm1486, %v1483, %v1092
      %v1517 = vsel %vm1486, %v1484, %v1094
      %v1518 = vsel %vm1486, %v1485, %v1096
      %vm1519 = vcmask 228352
      %v1520 = vsel %vm1519, %v1487, %v1130
      %v1521 = vsel %vm1519, %v1488, %v1132
      %v1522 = vsel %vm1519, %v1489, %v1134
      %v1523 = vsel %vm1519, %v1490, %v1136
      %v1524 = vsel %vm1519, %v1491, %v1138
      %v1525 = vsel %vm1519, %v1492, %v1140
      %v1526 = vsel %vm1519, %v1493, %v1142
      %v1527 = vsel %vm1519, %v1494, %v1144
      %v1528 = vsel %vm1519, %v1495, %v1146
      %v1529 = vsel %vm1519, %v1496, %v1148
      %v1530 = vsel %vm1519, %v1497, %v1150
      %v1531 = vsel %vm1519, %v1498, %v1152
      %v1532 = vsel %vm1519, %v1499, %v1154
      %v1533 = vsel %vm1519, %v1500, %v1156
      %v1534 = vsel %vm1519, %v1501, %v1158
      %v1535 = vsel %vm1519, %v1502, %v1160
      %v1536 = vsel %vm1519, %v1503, %v1162
      %v1537 = vsel %vm1519, %v1504, %v1164
      %v1538 = vsel %vm1519, %v1505, %v1166
      %v1539 = vsel %vm1519, %v1506, %v1168
      %v1540 = vsel %vm1519, %v1507, %v1170
      %v1541 = vsel %vm1519, %v1508, %v1172
      %v1542 = vsel %vm1519, %v1509, %v1174
      %v1543 = vsel %vm1519, %v1510, %v1176
      %v1544 = vsel %vm1519, %v1511, %v1178
      %v1545 = vsel %vm1519, %v1512, %v1180
      %v1546 = vsel %vm1519, %v1513, %v1182
      %v1547 = vsel %vm1519, %v1514, %v1184
      %v1548 = vsel %vm1519, %v1515, %v1186
      %v1549 = vsel %vm1519, %v1516, %v1188
      %v1550 = vsel %vm1519, %v1517, %v1190
      %v1551 = vsel %vm1519, %v1518, %v1192
      %vm1552 = vcmask 261120
      %v1553 = vsel %vm1552, %v1520, %v1226
      %v1554 = vsel %vm1552, %v1521, %v1228
      %v1555 = vsel %vm1552, %v1522, %v1230
      %v1556 = vsel %vm1552, %v1523, %v1232
      %v1557 = vsel %vm1552, %v1524, %v1234
      %v1558 = vsel %vm1552, %v1525, %v1236
      %v1559 = vsel %vm1552, %v1526, %v1238
      %v1560 = vsel %vm1552, %v1527, %v1240
      %v1561 = vsel %vm1552, %v1528, %v1242
      %v1562 = vsel %vm1552, %v1529, %v1244
      %v1563 = vsel %vm1552, %v1530, %v1246
      %v1564 = vsel %vm1552, %v1531, %v1248
      %v1565 = vsel %vm1552, %v1532, %v1250
      %v1566 = vsel %vm1552, %v1533, %v1252
      %v1567 = vsel %vm1552, %v1534, %v1254
      %v1568 = vsel %vm1552, %v1535, %v1256
      %v1569 = vsel %vm1552, %v1536, %v1258
      %v1570 = vsel %vm1552, %v1537, %v1260
      %v1571 = vsel %vm1552, %v1538, %v1262
      %v1572 = vsel %vm1552, %v1539, %v1264
      %v1573 = vsel %vm1552, %v1540, %v1266
      %v1574 = vsel %vm1552, %v1541, %v1268
      %v1575 = vsel %vm1552, %v1542, %v1270
      %v1576 = vsel %vm1552, %v1543, %v1272
      %v1577 = vsel %vm1552, %v1544, %v1274
      %v1578 = vsel %vm1552, %v1545, %v1276
      %v1579 = vsel %vm1552, %v1546, %v1278
      %v1580 = vsel %vm1552, %v1547, %v1280
      %v1581 = vsel %vm1552, %v1548, %v1282
      %v1582 = vsel %vm1552, %v1549, %v1284
      %v1583 = vsel %vm1552, %v1550, %v1286
      %v1584 = vsel %vm1552, %v1551, %v1288
      %v1586 = vlaneseq
      %v1587 = vshrl.u32 %v1586, 7
      %v1588 = vsub.s32 0, %v1587
      %v1589 = vrot.slane %v284, %v1588
      %vm1591 = vcmask 293888
      %v1593 = vsel %vm1591, %v1553, 0
      %v1596 = vsel %vm1591, %v1554, 0
      %v1599 = vsel %vm1591, %v1555, 0
      %v1602 = vsel %vm1591, %v1556, 0
      %v1605 = vsel %vm1591, %v1557, 0
      %v1608 = vsel %vm1591, %v1558, 0
      %v1611 = vsel %vm1591, %v1559, 0
      %v1614 = vsel %vm1591, %v1560, 0
      %v1617 = vsel %vm1591, %v1561, 0
      %v1620 = vsel %vm1591, %v1562, 0
      %v1623 = vsel %vm1591, %v1563, 0
      %v1626 = vsel %vm1591, %v1564, 0
      %v1629 = vsel %vm1591, %v1565, 0
      %v1632 = vsel %vm1591, %v1566, 0
      %v1635 = vsel %vm1591, %v1567, 0
      %v1638 = vsel %vm1591, %v1568, 0
      %v1641 = vsel %vm1591, %v1569, 0
      %v1644 = vsel %vm1591, %v1570, 0
      %v1647 = vsel %vm1591, %v1571, 0
      %v1650 = vsel %vm1591, %v1572, 0
      %v1653 = vsel %vm1591, %v1573, 0
      %v1656 = vsel %vm1591, %v1574, 0
      %v1659 = vsel %vm1591, %v1575, 0
      %v1662 = vsel %vm1591, %v1576, 0
      %v1665 = vsel %vm1591, %v1577, 0
      %v1668 = vsel %vm1591, %v1578, 0
      %v1671 = vsel %vm1591, %v1579, 0
      %v1674 = vsel %vm1591, %v1580, 0
      %v1677 = vsel %vm1591, %v1581, 0
      %v1680 = vsel %vm1591, %v1582, 0
      %v1683 = vsel %vm1591, %v1583, 0
      %v1686 = vsel %vm1591, %v1584, 0
      %vm1688 = vcmask 1043456
      %v1690 = vsel %vm1688, %v283, 0
      %1692 = vmatprep.subr.mxu0 0.0
      %1693 = vmatpush1.msra.mxu0 0.0
      %1694 = vmatprep.subr.mxu0 0.0
      %1695 = vmatpush1.msra.mxu0 0.0
      %1696 = vmatprep.subr.mxu0 0.0
      %1697 = vmatpush1.msra.mxu0 0.0
      %1698 = vmatprep.subr.mxu0 0.0
      %1699 = vmatpush1.msra.mxu0 0.0
      %1700 = vmatprep.subr.mxu0 0.0
      %1701 = vmatpush1.msra.mxu0 0.0
      %1702 = vmatprep.subr.mxu0 0.0
      %1703 = vmatpush1.msra.mxu0 0.0
      %1704 = vmatprep.subr.mxu0 0.0
      %1705 = vmatpush1.msra.mxu0 0.0
      %1706 = vmatprep.subr.mxu0 0.0
      %1707 = vmatpush1.msra.mxu0 0.0
      %1708 = vmatprep.subr.mxu0 0.0
      %1709 = vmatpush1.msra.mxu0 0.0
      %1710 = vmatprep.subr.mxu0 0.0
      %1711 = vmatpush1.msra.mxu0 0.0
      %1712 = vmatprep.subr.mxu0 0.0
      %1713 = vmatpush1.msra.mxu0 0.0
      %1714 = vmatprep.subr.mxu0 0.0
      %1715 = vmatpush1.msra.mxu0 %v1690
      %1716 = vmatprep.subr.mxu0 0.0
      %1717 = vmatpush1.msra.mxu0 %v282
      %1718 = vmatprep.subr.mxu0 0.0
      %1719 = vmatpush1.msra.mxu0 %v281
      %1720 = vmatprep.subr.mxu0 0.0
      %1721 = vmatpush1.msra.mxu0 %v280
      %1722 = vmatprep.subr.mxu0 0.0
      %1723 = vmatpush1.msra.mxu0 %v279
      %1724 = vmatprep.subr.mxu0 0.0
      %1725 = vmatpush2.msra.mxu0 0.0
      %1726 = vmatprep.subr.mxu0 0.0
      %1727 = vmatpush2.msra.mxu0 0.0
      %1728 = vmatprep.subr.mxu0 0.0
      %1729 = vmatpush2.msra.mxu0 0.0
      %1730 = vmatprep.subr.mxu0 0.0
      %1731 = vmatpush2.msra.mxu0 0.0
      %1732 = vmatprep.subr.mxu0 0.0
      %1733 = vmatpush2.msra.mxu0 0.0
      %1734 = vmatprep.subr.mxu0 0.0
      %1735 = vmatpush2.msra.mxu0 0.0
      %1736 = vmatprep.subr.mxu0 0.0
      %1737 = vmatpush2.msra.mxu0 0.0
      %1738 = vmatprep.subr.mxu0 0.0
      %1739 = vmatpush2.msra.mxu0 0.0
      %1740 = vmatprep.subr.mxu0 0.0
      %1741 = vmatpush2.msra.mxu0 0.0
      %1742 = vmatprep.subr.mxu0 0.0
      %1743 = vmatpush2.msra.mxu0 0.0
      %1744 = vmatprep.subr.mxu0 0.0
      %1745 = vmatpush2.msra.mxu0 0.0
      %1746 = vmatprep.subr.mxu0 0.0
      %1747 = vmatpush2.msra.mxu0 0.0
      %1748 = vmatprep.subr.mxu0 0.0
      %1749 = vmatpush2.msra.mxu0 0.0
      %1750 = vmatprep.subr.mxu0 0.0
      %1751 = vmatpush2.msra.mxu0 0.0
      %1752 = vmatprep.subr.mxu0 0.0
      %1753 = vmatpush2.msra.mxu0 0.0
      %1754 = vmatprep.subr.mxu0 0.0
      %1755 = vmatpush2.msra.mxu0 0.0
      %1756 = vmatprep.mubr.f32.mxu0 0.0
      %1757 = vmatmul.mubr.f32.gmra.mxu0 %v1593
      %v1758 = vpop.f32.mrf.mxu0
      %v1759 = vadd.f32 %v1589, %v1758
      %v1760 = vpop.f32.mrf.mxu0
      %1761 = vmatprep.mubr.f32.mxu0 0.0
      %1762 = vmatmul.mubr.f32.gmra.mxu0 %v1596
      %v1763 = vpop.f32.mrf.mxu0
      %v1764 = vadd.f32 %v1589, %v1763
      %v1765 = vpop.f32.mrf.mxu0
      %1766 = vmatprep.mubr.f32.mxu0 0.0
      %1767 = vmatmul.mubr.f32.gmra.mxu0 %v1599
      %v1768 = vpop.f32.mrf.mxu0
      %v1769 = vadd.f32 %v1589, %v1768
      %v1770 = vpop.f32.mrf.mxu0
      %1771 = vmatprep.mubr.f32.mxu0 0.0
      %1772 = vmatmul.mubr.f32.gmra.mxu0 %v1602
      %v1773 = vpop.f32.mrf.mxu0
      %v1774 = vadd.f32 %v1589, %v1773
      %v1775 = vpop.f32.mrf.mxu0
      %1776 = vmatprep.mubr.f32.mxu0 0.0
      %1777 = vmatmul.mubr.f32.gmra.mxu0 %v1605
      %v1778 = vpop.f32.mrf.mxu0
      %v1779 = vadd.f32 %v1589, %v1778
      %v1780 = vpop.f32.mrf.mxu0
      %1781 = vmatprep.mubr.f32.mxu0 0.0
      %1782 = vmatmul.mubr.f32.gmra.mxu0 %v1608
      %v1783 = vpop.f32.mrf.mxu0
      %v1784 = vadd.f32 %v1589, %v1783
      %v1785 = vpop.f32.mrf.mxu0
      %1786 = vmatprep.mubr.f32.mxu0 0.0
      %1787 = vmatmul.mubr.f32.gmra.mxu0 %v1611
      %v1788 = vpop.f32.mrf.mxu0
      %v1789 = vadd.f32 %v1589, %v1788
      %v1790 = vpop.f32.mrf.mxu0
      %1791 = vmatprep.mubr.f32.mxu0 0.0
      %1792 = vmatmul.mubr.f32.gmra.mxu0 %v1614
      %v1793 = vpop.f32.mrf.mxu0
      %v1794 = vadd.f32 %v1589, %v1793
      %v1795 = vpop.f32.mrf.mxu0
      %1796 = vmatprep.mubr.f32.mxu0 0.0
      %1797 = vmatmul.mubr.f32.gmra.mxu0 %v1617
      %v1798 = vpop.f32.mrf.mxu0
      %v1799 = vadd.f32 %v1589, %v1798
      %v1800 = vpop.f32.mrf.mxu0
      %1801 = vmatprep.mubr.f32.mxu0 0.0
      %1802 = vmatmul.mubr.f32.gmra.mxu0 %v1620
      %v1803 = vpop.f32.mrf.mxu0
      %v1804 = vadd.f32 %v1589, %v1803
      %v1805 = vpop.f32.mrf.mxu0
      %1806 = vmatprep.mubr.f32.mxu0 0.0
      %1807 = vmatmul.mubr.f32.gmra.mxu0 %v1623
      %v1808 = vpop.f32.mrf.mxu0
      %v1809 = vadd.f32 %v1589, %v1808
      %v1810 = vpop.f32.mrf.mxu0
      %1811 = vmatprep.mubr.f32.mxu0 0.0
      %1812 = vmatmul.mubr.f32.gmra.mxu0 %v1626
      %v1813 = vpop.f32.mrf.mxu0
      %v1814 = vadd.f32 %v1589, %v1813
      %v1815 = vpop.f32.mrf.mxu0
      %1816 = vmatprep.mubr.f32.mxu0 0.0
      %1817 = vmatmul.mubr.f32.gmra.mxu0 %v1629
      %v1818 = vpop.f32.mrf.mxu0
      %v1819 = vadd.f32 %v1589, %v1818
      %v1820 = vpop.f32.mrf.mxu0
      %1821 = vmatprep.mubr.f32.mxu0 0.0
      %1822 = vmatmul.mubr.f32.gmra.mxu0 %v1632
      %v1823 = vpop.f32.mrf.mxu0
      %v1824 = vadd.f32 %v1589, %v1823
      %v1825 = vpop.f32.mrf.mxu0
      %1826 = vmatprep.mubr.f32.mxu0 0.0
      %1827 = vmatmul.mubr.f32.gmra.mxu0 %v1635
      %v1828 = vpop.f32.mrf.mxu0
      %v1829 = vadd.f32 %v1589, %v1828
      %v1830 = vpop.f32.mrf.mxu0
      %1831 = vmatprep.mubr.f32.mxu0 0.0
      %1832 = vmatmul.mubr.f32.gmra.mxu0 %v1638
      %v1833 = vpop.f32.mrf.mxu0
      %v1834 = vadd.f32 %v1589, %v1833
      %v1835 = vpop.f32.mrf.mxu0
      %1836 = vmatprep.mubr.f32.mxu0 0.0
      %1837 = vmatmul.mubr.f32.gmra.mxu0 %v1641
      %v1838 = vpop.f32.mrf.mxu0
      %v1839 = vadd.f32 %v1589, %v1838
      %v1840 = vpop.f32.mrf.mxu0
      %1841 = vmatprep.mubr.f32.mxu0 0.0
      %1842 = vmatmul.mubr.f32.gmra.mxu0 %v1644
      %v1843 = vpop.f32.mrf.mxu0
      %v1844 = vadd.f32 %v1589, %v1843
      %v1845 = vpop.f32.mrf.mxu0
      %1846 = vmatprep.mubr.f32.mxu0 0.0
      %1847 = vmatmul.mubr.f32.gmra.mxu0 %v1647
      %v1848 = vpop.f32.mrf.mxu0
      %v1849 = vadd.f32 %v1589, %v1848
      %v1850 = vpop.f32.mrf.mxu0
      %1851 = vmatprep.mubr.f32.mxu0 0.0
      %1852 = vmatmul.mubr.f32.gmra.mxu0 %v1650
      %v1853 = vpop.f32.mrf.mxu0
      %v1854 = vadd.f32 %v1589, %v1853
      %v1855 = vpop.f32.mrf.mxu0
      %1856 = vmatprep.mubr.f32.mxu0 0.0
      %1857 = vmatmul.mubr.f32.gmra.mxu0 %v1653
      %v1858 = vpop.f32.mrf.mxu0
      %v1859 = vadd.f32 %v1589, %v1858
      %v1860 = vpop.f32.mrf.mxu0
      %1861 = vmatprep.mubr.f32.mxu0 0.0
      %1862 = vmatmul.mubr.f32.gmra.mxu0 %v1656
      %v1863 = vpop.f32.mrf.mxu0
      %v1864 = vadd.f32 %v1589, %v1863
      %v1865 = vpop.f32.mrf.mxu0
      %1866 = vmatprep.mubr.f32.mxu0 0.0
      %1867 = vmatmul.mubr.f32.gmra.mxu0 %v1659
      %v1868 = vpop.f32.mrf.mxu0
      %v1869 = vadd.f32 %v1589, %v1868
      %v1870 = vpop.f32.mrf.mxu0
      %1871 = vmatprep.mubr.f32.mxu0 0.0
      %1872 = vmatmul.mubr.f32.gmra.mxu0 %v1662
      %v1873 = vpop.f32.mrf.mxu0
      %v1874 = vadd.f32 %v1589, %v1873
      %v1875 = vpop.f32.mrf.mxu0
      %1876 = vmatprep.mubr.f32.mxu0 0.0
      %1877 = vmatmul.mubr.f32.gmra.mxu0 %v1665
      %v1878 = vpop.f32.mrf.mxu0
      %v1879 = vadd.f32 %v1589, %v1878
      %v1880 = vpop.f32.mrf.mxu0
      %1881 = vmatprep.mubr.f32.mxu0 0.0
      %1882 = vmatmul.mubr.f32.gmra.mxu0 %v1668
      %v1883 = vpop.f32.mrf.mxu0
      %v1884 = vadd.f32 %v1589, %v1883
      %v1885 = vpop.f32.mrf.mxu0
      %1886 = vmatprep.mubr.f32.mxu0 0.0
      %1887 = vmatmul.mubr.f32.gmra.mxu0 %v1671
      %v1888 = vpop.f32.mrf.mxu0
      %v1889 = vadd.f32 %v1589, %v1888
      %v1890 = vpop.f32.mrf.mxu0
      %1891 = vmatprep.mubr.f32.mxu0 0.0
      %1892 = vmatmul.mubr.f32.gmra.mxu0 %v1674
      %v1893 = vpop.f32.mrf.mxu0
      %v1894 = vadd.f32 %v1589, %v1893
      %v1895 = vpop.f32.mrf.mxu0
      %1896 = vmatprep.mubr.f32.mxu0 0.0
      %1897 = vmatmul.mubr.f32.gmra.mxu0 %v1677
      %v1898 = vpop.f32.mrf.mxu0
      %v1899 = vadd.f32 %v1589, %v1898
      %v1900 = vpop.f32.mrf.mxu0
      %1901 = vmatprep.mubr.f32.mxu0 0.0
      %1902 = vmatmul.mubr.f32.gmra.mxu0 %v1680
      %v1903 = vpop.f32.mrf.mxu0
      %v1904 = vadd.f32 %v1589, %v1903
      %v1905 = vpop.f32.mrf.mxu0
      %1906 = vmatprep.mubr.f32.mxu0 0.0
      %1907 = vmatmul.mubr.f32.gmra.mxu0 %v1683
      %v1908 = vpop.f32.mrf.mxu0
      %v1909 = vadd.f32 %v1589, %v1908
      %v1910 = vpop.f32.mrf.mxu0
      %1911 = vmatprep.mubr.f32.mxu0 0.0
      %1912 = vmatmul.mubr.f32.gmra.mxu0 %v1686
      %v1913 = vpop.f32.mrf.mxu0
      %v1914 = vadd.f32 %v1589, %v1913
      %v1915 = vpop.f32.mrf.mxu0
      %1916 = vdwg.mxu0
      %v1917 = vmax.f32 %v1759, 0.0
      %v1918 = vmax.f32 %v1764, 0.0
      %v1919 = vmax.f32 %v1769, 0.0
      %v1920 = vmax.f32 %v1774, 0.0
      %v1921 = vmax.f32 %v1779, 0.0
      %v1922 = vmax.f32 %v1784, 0.0
      %v1923 = vmax.f32 %v1789, 0.0
      %v1924 = vmax.f32 %v1794, 0.0
      %v1925 = vmax.f32 %v1799, 0.0
      %v1926 = vmax.f32 %v1804, 0.0
      %v1927 = vmax.f32 %v1809, 0.0
      %v1928 = vmax.f32 %v1814, 0.0
      %v1929 = vmax.f32 %v1819, 0.0
      %v1930 = vmax.f32 %v1824, 0.0
      %v1931 = vmax.f32 %v1829, 0.0
      %v1932 = vmax.f32 %v1834, 0.0
      %v1933 = vmax.f32 %v1839, 0.0
      %v1934 = vmax.f32 %v1844, 0.0
      %v1935 = vmax.f32 %v1849, 0.0
      %v1936 = vmax.f32 %v1854, 0.0
      %v1937 = vmax.f32 %v1859, 0.0
      %v1938 = vmax.f32 %v1864, 0.0
      %v1939 = vmax.f32 %v1869, 0.0
      %v1940 = vmax.f32 %v1874, 0.0
      %v1941 = vmax.f32 %v1879, 0.0
      %v1942 = vmax.f32 %v1884, 0.0
      %v1943 = vmax.f32 %v1889, 0.0
      %v1944 = vmax.f32 %v1894, 0.0
      %v1945 = vmax.f32 %v1899, 0.0
      %v1946 = vmax.f32 %v1904, 0.0
      %v1947 = vmax.f32 %v1909, 0.0
      %v1948 = vmax.f32 %v1914, 0.0
      %vm1981 = vcmask 1040384
      %v1982 = vrot.slane %v1917, 7
      %v1983 = vrot.slane %v1918, 7
      %v1984 = vsel %vm1981, %v1982, %v1983
      %v1985 = vrot.slane %v1919, 7
      %v1986 = vrot.slane %v1920, 7
      %v1987 = vsel %vm1981, %v1985, %v1986
      %v1988 = vrot.slane %v1921, 7
      %v1989 = vrot.slane %v1922, 7
      %v1990 = vsel %vm1981, %v1988, %v1989
      %v1991 = vrot.slane %v1923, 7
      %v1992 = vrot.slane %v1924, 7
      %v1993 = vsel %vm1981, %v1991, %v1992
      %v1994 = vrot.slane %v1925, 7
      %v1995 = vrot.slane %v1926, 7
      %v1996 = vsel %vm1981, %v1994, %v1995
      %v1997 = vrot.slane %v1927, 7
      %v1998 = vrot.slane %v1928, 7
      %v1999 = vsel %vm1981, %v1997, %v1998
      %v2000 = vrot.slane %v1929, 7
      %v2001 = vrot.slane %v1930, 7
      %v2002 = vsel %vm1981, %v2000, %v2001
      %v2003 = vrot.slane %v1931, 7
      %v2004 = vrot.slane %v1932, 7
      %v2005 = vsel %vm1981, %v2003, %v2004
      %v2006 = vrot.slane %v1933, 7
      %v2007 = vrot.slane %v1934, 7
      %v2008 = vsel %vm1981, %v2006, %v2007
      %v2009 = vrot.slane %v1935, 7
      %v2010 = vrot.slane %v1936, 7
      %v2011 = vsel %vm1981, %v2009, %v2010
      %v2012 = vrot.slane %v1937, 7
      %v2013 = vrot.slane %v1938, 7
      %v2014 = vsel %vm1981, %v2012, %v2013
      %v2015 = vrot.slane %v1939, 7
      %v2016 = vrot.slane %v1940, 7
      %v2017 = vsel %vm1981, %v2015, %v2016
      %v2018 = vrot.slane %v1941, 7
      %v2019 = vrot.slane %v1942, 7
      %v2020 = vsel %vm1981, %v2018, %v2019
      %v2021 = vrot.slane %v1943, 7
      %v2022 = vrot.slane %v1944, 7
      %v2023 = vsel %vm1981, %v2021, %v2022
      %v2024 = vrot.slane %v1945, 7
      %v2025 = vrot.slane %v1946, 7
      %v2026 = vsel %vm1981, %v2024, %v2025
      %v2027 = vrot.slane %v1947, 7
      %v2028 = vrot.slane %v1948, 7
      %v2029 = vsel %vm1981, %v2027, %v2028
      %v2077 = vsel %vm1981, 0.0, %v1982
      %v2078 = vsel %vm1981, 0.0, %v1985
      %v2079 = vsel %vm1981, 0.0, %v1988
      %v2080 = vsel %vm1981, 0.0, %v1991
      %v2081 = vsel %vm1981, 0.0, %v1994
      %v2082 = vsel %vm1981, 0.0, %v1997
      %v2083 = vsel %vm1981, 0.0, %v2000
      %v2084 = vsel %vm1981, 0.0, %v2003
      %v2085 = vsel %vm1981, 0.0, %v2006
      %v2086 = vsel %vm1981, 0.0, %v2009
      %v2087 = vsel %vm1981, 0.0, %v2012
      %v2088 = vsel %vm1981, 0.0, %v2015
      %v2089 = vsel %vm1981, 0.0, %v2018
      %v2090 = vsel %vm1981, 0.0, %v2021
      %v2091 = vsel %vm1981, 0.0, %v2024
      %v2092 = vsel %vm1981, 0.0, %v2027
      %v2093 = vsel %vm1981, %v1983, 0.0
      %v2094 = vsel %vm1981, %v1986, 0.0
      %v2095 = vsel %vm1981, %v1989, 0.0
      %v2096 = vsel %vm1981, %v1992, 0.0
      %v2097 = vsel %vm1981, %v1995, 0.0
      %v2098 = vsel %vm1981, %v1998, 0.0
      %v2099 = vsel %vm1981, %v2001, 0.0
      %v2100 = vsel %vm1981, %v2004, 0.0
      %v2101 = vsel %vm1981, %v2007, 0.0
      %v2102 = vsel %vm1981, %v2010, 0.0
      %v2103 = vsel %vm1981, %v2013, 0.0
      %v2104 = vsel %vm1981, %v2016, 0.0
      %v2105 = vsel %vm1981, %v2019, 0.0
      %v2106 = vsel %vm1981, %v2022, 0.0
      %v2107 = vsel %vm1981, %v2025, 0.0
      %v2108 = vsel %vm1981, %v2028, 0.0
      %v2109 = vld [vmem:[%s3] sm:$0xff]
      %v2110 = vld [vmem:[%s3 + $0x8] sm:$0xff]
      %v2111 = vld [vmem:[%s3 + $0x10] sm:$0xff]
      %v2112 = vld [vmem:[%s3 + $0x18] sm:$0xff]
      %v2113 = vld [vmem:[%s3 + $0x20] sm:$0xf]
      %v2114 = vld [vmem:[%s4] sm:$0x1]
      %v2146 = vrot.slane 0.0, 1
      %v2147 = vsel %vm333, %v2146, %v2146
      %v2148 = vrot.slane %v2077, 1
      %v2149 = vrot.slane %v1984, 1
      %v2150 = vsel %vm333, %v2148, %v2149
      %v2151 = vrot.slane %v2093, 1
      %v2152 = vsel %vm333, %v2149, %v2151
      %v2153 = vrot.slane %v2078, 1
      %v2154 = vrot.slane %v1987, 1
      %v2155 = vsel %vm333, %v2153, %v2154
      %v2156 = vrot.slane %v2094, 1
      %v2157 = vsel %vm333, %v2154, %v2156
      %v2158 = vrot.slane %v2079, 1
      %v2159 = vrot.slane %v1990, 1
      %v2160 = vsel %vm333, %v2158, %v2159
      %v2161 = vrot.slane %v2095, 1
      %v2162 = vsel %vm333, %v2159, %v2161
      %v2163 = vrot.slane %v2080, 1
      %v2164 = vrot.slane %v1993, 1
      %v2165 = vsel %vm333, %v2163, %v2164
      %v2166 = vrot.slane %v2096, 1
      %v2167 = vsel %vm333, %v2164, %v2166
      %v2168 = vrot.slane %v2081, 1
      %v2169 = vrot.slane %v1996, 1
      %v2170 = vsel %vm333, %v2168, %v2169
      %v2171 = vrot.slane %v2097, 1
      %v2172 = vsel %vm333, %v2169, %v2171
      %v2173 = vrot.slane %v2082, 1
      %v2174 = vrot.slane %v1999, 1
      %v2175 = vsel %vm333, %v2173, %v2174
      %v2176 = vrot.slane %v2098, 1
      %v2177 = vsel %vm333, %v2174, %v2176
      %v2178 = vrot.slane %v2083, 1
      %v2179 = vrot.slane %v2002, 1
      %v2180 = vsel %vm333, %v2178, %v2179
      %v2181 = vrot.slane %v2099, 1
      %v2182 = vsel %vm333, %v2179, %v2181
      %v2183 = vrot.slane %v2084, 1
      %v2184 = vrot.slane %v2005, 1
      %v2185 = vsel %vm333, %v2183, %v2184
      %v2186 = vrot.slane %v2100, 1
      %v2187 = vsel %vm333, %v2184, %v2186
      %v2188 = vrot.slane %v2085, 1
      %v2189 = vrot.slane %v2008, 1
      %v2190 = vsel %vm333, %v2188, %v2189
      %v2191 = vrot.slane %v2101, 1
      %v2192 = vsel %vm333, %v2189, %v2191
      %v2193 = vrot.slane %v2086, 1
      %v2194 = vrot.slane %v2011, 1
      %v2195 = vsel %vm333, %v2193, %v2194
      %v2196 = vrot.slane %v2102, 1
      %v2197 = vsel %vm333, %v2194, %v2196
      %v2198 = vrot.slane %v2087, 1
      %v2199 = vrot.slane %v2014, 1
      %v2200 = vsel %vm333, %v2198, %v2199
      %v2201 = vrot.slane %v2103, 1
      %v2202 = vsel %vm333, %v2199, %v2201
      %v2203 = vrot.slane %v2088, 1
      %v2204 = vrot.slane %v2017, 1
      %v2205 = vsel %vm333, %v2203, %v2204
      %v2206 = vrot.slane %v2104, 1
      %v2207 = vsel %vm333, %v2204, %v2206
      %v2208 = vrot.slane %v2089, 1
      %v2209 = vrot.slane %v2020, 1
      %v2210 = vsel %vm333, %v2208, %v2209
      %v2211 = vrot.slane %v2105, 1
      %v2212 = vsel %vm333, %v2209, %v2211
      %v2213 = vrot.slane %v2090, 1
      %v2214 = vrot.slane %v2023, 1
      %v2215 = vsel %vm333, %v2213, %v2214
      %v2216 = vrot.slane %v2106, 1
      %v2217 = vsel %vm333, %v2214, %v2216
      %v2218 = vrot.slane %v2091, 1
      %v2219 = vrot.slane %v2026, 1
      %v2220 = vsel %vm333, %v2218, %v2219
      %v2221 = vrot.slane %v2107, 1
      %v2222 = vsel %vm333, %v2219, %v2221
      %v2223 = vrot.slane 0.0, 2
      %v2224 = vsel %vm414, %v2223, %v2223
      %v2225 = vrot.slane %v2077, 2
      %v2226 = vrot.slane %v1984, 2
      %v2227 = vsel %vm414, %v2225, %v2226
      %v2228 = vrot.slane %v2093, 2
      %v2229 = vsel %vm414, %v2226, %v2228
      %v2230 = vrot.slane %v2078, 2
      %v2231 = vrot.slane %v1987, 2
      %v2232 = vsel %vm414, %v2230, %v2231
      %v2233 = vrot.slane %v2094, 2
      %v2234 = vsel %vm414, %v2231, %v2233
      %v2235 = vrot.slane %v2079, 2
      %v2236 = vrot.slane %v1990, 2
      %v2237 = vsel %vm414, %v2235, %v2236
      %v2238 = vrot.slane %v2095, 2
      %v2239 = vsel %vm414, %v2236, %v2238
      %v2240 = vrot.slane %v2080, 2
      %v2241 = vrot.slane %v1993, 2
      %v2242 = vsel %vm414, %v2240, %v2241
      %v2243 = vrot.slane %v2096, 2
      %v2244 = vsel %vm414, %v2241, %v2243
      %v2245 = vrot.slane %v2081, 2
      %v2246 = vrot.slane %v1996, 2
      %v2247 = vsel %vm414, %v2245, %v2246
      %v2248 = vrot.slane %v2097, 2
      %v2249 = vsel %vm414, %v2246, %v2248
      %v2250 = vrot.slane %v2082, 2
      %v2251 = vrot.slane %v1999, 2
      %v2252 = vsel %vm414, %v2250, %v2251
      %v2253 = vrot.slane %v2098, 2
      %v2254 = vsel %vm414, %v2251, %v2253
      %v2255 = vrot.slane %v2083, 2
      %v2256 = vrot.slane %v2002, 2
      %v2257 = vsel %vm414, %v2255, %v2256
      %v2258 = vrot.slane %v2099, 2
      %v2259 = vsel %vm414, %v2256, %v2258
      %v2260 = vrot.slane %v2084, 2
      %v2261 = vrot.slane %v2005, 2
      %v2262 = vsel %vm414, %v2260, %v2261
      %v2263 = vrot.slane %v2100, 2
      %v2264 = vsel %vm414, %v2261, %v2263
      %v2265 = vrot.slane %v2085, 2
      %v2266 = vrot.slane %v2008, 2
      %v2267 = vsel %vm414, %v2265, %v2266
      %v2268 = vrot.slane %v2101, 2
      %v2269 = vsel %vm414, %v2266, %v2268
      %v2270 = vrot.slane %v2086, 2
      %v2271 = vrot.slane %v2011, 2
      %v2272 = vsel %vm414, %v2270, %v2271
      %v2273 = vrot.slane %v2102, 2
      %v2274 = vsel %vm414, %v2271, %v2273
      %v2275 = vrot.slane %v2087, 2
      %v2276 = vrot.slane %v2014, 2
      %v2277 = vsel %vm414, %v2275, %v2276
      %v2278 = vrot.slane %v2103, 2
      %v2279 = vsel %vm414, %v2276, %v2278
      %v2280 = vrot.slane %v2088, 2
      %v2281 = vrot.slane %v2017, 2
      %v2282 = vsel %vm414, %v2280, %v2281
      %v2283 = vrot.slane %v2104, 2
      %v2284 = vsel %vm414, %v2281, %v2283
      %v2285 = vrot.slane %v2089, 2
      %v2286 = vrot.slane %v2020, 2
      %v2287 = vsel %vm414, %v2285, %v2286
      %v2288 = vrot.slane %v2105, 2
      %v2289 = vsel %vm414, %v2286, %v2288
      %v2290 = vrot.slane %v2090, 2
      %v2291 = vrot.slane %v2023, 2
      %v2292 = vsel %vm414, %v2290, %v2291
      %v2293 = vrot.slane %v2106, 2
      %v2294 = vsel %vm414, %v2291, %v2293
      %v2295 = vrot.slane %v2091, 2
      %v2296 = vrot.slane %v2026, 2
      %v2297 = vsel %vm414, %v2295, %v2296
      %v2298 = vrot.slane %v2107, 2
      %v2299 = vsel %vm414, %v2296, %v2298
      %v2302 = vrot.slane %v2092, 1
      %v2303 = vrot.slane %v2029, 1
      %v2304 = vsel %vm333, %v2302, %v2303
      %v2305 = vrot.slane %v2108, 1
      %v2306 = vsel %vm333, %v2303, %v2305
      %v2307 = vrot.slane %v2092, 2
      %v2308 = vrot.slane %v2029, 2
      %v2309 = vsel %vm414, %v2307, %v2308
      %v2310 = vrot.slane %v2108, 2
      %v2311 = vsel %vm414, %v2308, %v2310
      %2312 = vrot.lane.b32.xlu0 %v2147, 4
      %v2313 = vpop.permute.xlu0 %2312
      %2314 = vrot.lane.b32.xlu0 %v2150, 4
      %v2315 = vpop.permute.xlu0 %2314
      %2316 = vrot.lane.b32.xlu0 %v2152, 4
      %v2317 = vpop.permute.xlu0 %2316
      %2318 = vrot.lane.b32.xlu0 %v2155, 4
      %v2319 = vpop.permute.xlu0 %2318
      %2320 = vrot.lane.b32.xlu0 %v2157, 4
      %v2321 = vpop.permute.xlu0 %2320
      %2322 = vrot.lane.b32.xlu0 %v2160, 4
      %v2323 = vpop.permute.xlu0 %2322
      %2324 = vrot.lane.b32.xlu0 %v2162, 4
      %v2325 = vpop.permute.xlu0 %2324
      %2326 = vrot.lane.b32.xlu0 %v2165, 4
      %v2327 = vpop.permute.xlu0 %2326
      %2328 = vrot.lane.b32.xlu0 %v2167, 4
      %v2329 = vpop.permute.xlu0 %2328
      %2330 = vrot.lane.b32.xlu0 %v2170, 4
      %v2331 = vpop.permute.xlu0 %2330
      %2332 = vrot.lane.b32.xlu0 %v2172, 4
      %v2333 = vpop.permute.xlu0 %2332
      %2334 = vrot.lane.b32.xlu0 %v2175, 4
      %v2335 = vpop.permute.xlu0 %2334
      %2336 = vrot.lane.b32.xlu0 %v2177, 4
      %v2337 = vpop.permute.xlu0 %2336
      %2338 = vrot.lane.b32.xlu0 %v2180, 4
      %v2339 = vpop.permute.xlu0 %2338
      %2340 = vrot.lane.b32.xlu0 %v2182, 4
      %v2341 = vpop.permute.xlu0 %2340
      %2342 = vrot.lane.b32.xlu0 %v2185, 4
      %v2343 = vpop.permute.xlu0 %2342
      %2344 = vrot.lane.b32.xlu0 %v2187, 4
      %v2345 = vpop.permute.xlu0 %2344
      %2346 = vrot.lane.b32.xlu0 %v2190, 4
      %v2347 = vpop.permute.xlu0 %2346
      %2348 = vrot.lane.b32.xlu0 %v2192, 4
      %v2349 = vpop.permute.xlu0 %2348
      %2350 = vrot.lane.b32.xlu0 %v2195, 4
      %v2351 = vpop.permute.xlu0 %2350
      %2352 = vrot.lane.b32.xlu0 %v2197, 4
      %v2353 = vpop.permute.xlu0 %2352
      %2354 = vrot.lane.b32.xlu0 %v2200, 4
      %v2355 = vpop.permute.xlu0 %2354
      %2356 = vrot.lane.b32.xlu0 %v2202, 4
      %v2357 = vpop.permute.xlu0 %2356
      %2358 = vrot.lane.b32.xlu0 %v2205, 4
      %v2359 = vpop.permute.xlu0 %2358
      %2360 = vrot.lane.b32.xlu0 %v2207, 4
      %v2361 = vpop.permute.xlu0 %2360
      %2362 = vrot.lane.b32.xlu0 %v2210, 4
      %v2363 = vpop.permute.xlu0 %2362
      %2364 = vrot.lane.b32.xlu0 %v2212, 4
      %v2365 = vpop.permute.xlu0 %2364
      %2366 = vrot.lane.b32.xlu0 %v2215, 4
      %v2367 = vpop.permute.xlu0 %2366
      %2368 = vrot.lane.b32.xlu0 %v2217, 4
      %v2369 = vpop.permute.xlu0 %2368
      %2370 = vrot.lane.b32.xlu0 %v2220, 4
      %v2371 = vpop.permute.xlu0 %2370
      %2372 = vrot.lane.b32.xlu0 %v2222, 4
      %v2373 = vpop.permute.xlu0 %2372
      %2405 = vrot.lane.b32.xlu0 %v2224, 8
      %v2406 = vpop.permute.xlu0 %2405
      %2407 = vrot.lane.b32.xlu0 %v2227, 8
      %v2408 = vpop.permute.xlu0 %2407
      %2409 = vrot.lane.b32.xlu0 %v2229, 8
      %v2410 = vpop.permute.xlu0 %2409
      %2411 = vrot.lane.b32.xlu0 %v2232, 8
      %v2412 = vpop.permute.xlu0 %2411
      %2413 = vrot.lane.b32.xlu0 %v2234, 8
      %v2414 = vpop.permute.xlu0 %2413
      %2415 = vrot.lane.b32.xlu0 %v2237, 8
      %v2416 = vpop.permute.xlu0 %2415
      %2417 = vrot.lane.b32.xlu0 %v2239, 8
      %v2418 = vpop.permute.xlu0 %2417
      %2419 = vrot.lane.b32.xlu0 %v2242, 8
      %v2420 = vpop.permute.xlu0 %2419
      %2421 = vrot.lane.b32.xlu0 %v2244, 8
      %v2422 = vpop.permute.xlu0 %2421
      %2423 = vrot.lane.b32.xlu0 %v2247, 8
      %v2424 = vpop.permute.xlu0 %2423
      %2425 = vrot.lane.b32.xlu0 %v2249, 8
      %v2426 = vpop.permute.xlu0 %2425
      %2427 = vrot.lane.b32.xlu0 %v2252, 8
      %v2428 = vpop.permute.xlu0 %2427
      %2429 = vrot.lane.b32.xlu0 %v2254, 8
      %v2430 = vpop.permute.xlu0 %2429
      %2431 = vrot.lane.b32.xlu0 %v2257, 8
      %v2432 = vpop.permute.xlu0 %2431
      %2433 = vrot.lane.b32.xlu0 %v2259, 8
      %v2434 = vpop.permute.xlu0 %2433
      %2435 = vrot.lane.b32.xlu0 %v2262, 8
      %v2436 = vpop.permute.xlu0 %2435
      %2437 = vrot.lane.b32.xlu0 %v2264, 8
      %v2438 = vpop.permute.xlu0 %2437
      %2439 = vrot.lane.b32.xlu0 %v2267, 8
      %v2440 = vpop.permute.xlu0 %2439
      %2441 = vrot.lane.b32.xlu0 %v2269, 8
      %v2442 = vpop.permute.xlu0 %2441
      %2443 = vrot.lane.b32.xlu0 %v2272, 8
      %v2444 = vpop.permute.xlu0 %2443
      %2445 = vrot.lane.b32.xlu0 %v2274, 8
      %v2446 = vpop.permute.xlu0 %2445
      %2447 = vrot.lane.b32.xlu0 %v2277, 8
      %v2448 = vpop.permute.xlu0 %2447
      %2449 = vrot.lane.b32.xlu0 %v2279, 8
      %v2450 = vpop.permute.xlu0 %2449
      %2451 = vrot.lane.b32.xlu0 %v2282, 8
      %v2452 = vpop.permute.xlu0 %2451
      %2453 = vrot.lane.b32.xlu0 %v2284, 8
      %v2454 = vpop.permute.xlu0 %2453
      %2455 = vrot.lane.b32.xlu0 %v2287, 8
      %v2456 = vpop.permute.xlu0 %2455
      %2457 = vrot.lane.b32.xlu0 %v2289, 8
      %v2458 = vpop.permute.xlu0 %2457
      %2459 = vrot.lane.b32.xlu0 %v2292, 8
      %v2460 = vpop.permute.xlu0 %2459
      %2461 = vrot.lane.b32.xlu0 %v2294, 8
      %v2462 = vpop.permute.xlu0 %2461
      %2463 = vrot.lane.b32.xlu0 %v2297, 8
      %v2464 = vpop.permute.xlu0 %2463
      %2465 = vrot.lane.b32.xlu0 %v2299, 8
      %v2466 = vpop.permute.xlu0 %2465
      %2498 = vrot.lane.b32.xlu0 %v2077, 12
      %v2499 = vpop.permute.xlu0 %2498
      %2500 = vrot.lane.b32.xlu0 %v1984, 12
      %v2501 = vpop.permute.xlu0 %2500
      %2502 = vrot.lane.b32.xlu0 %v2078, 12
      %v2503 = vpop.permute.xlu0 %2502
      %2504 = vrot.lane.b32.xlu0 %v1987, 12
      %v2505 = vpop.permute.xlu0 %2504
      %2506 = vrot.lane.b32.xlu0 %v2079, 12
      %v2507 = vpop.permute.xlu0 %2506
      %2508 = vrot.lane.b32.xlu0 %v1990, 12
      %v2509 = vpop.permute.xlu0 %2508
      %2510 = vrot.lane.b32.xlu0 %v2080, 12
      %v2511 = vpop.permute.xlu0 %2510
      %2512 = vrot.lane.b32.xlu0 %v1993, 12
      %v2513 = vpop.permute.xlu0 %2512
      %2514 = vrot.lane.b32.xlu0 %v2081, 12
      %v2515 = vpop.permute.xlu0 %2514
      %2516 = vrot.lane.b32.xlu0 %v1996, 12
      %v2517 = vpop.permute.xlu0 %2516
      %2518 = vrot.lane.b32.xlu0 %v2082, 12
      %v2519 = vpop.permute.xlu0 %2518
      %2520 = vrot.lane.b32.xlu0 %v1999, 12
      %v2521 = vpop.permute.xlu0 %2520
      %2522 = vrot.lane.b32.xlu0 %v2083, 12
      %v2523 = vpop.permute.xlu0 %2522
      %2524 = vrot.lane.b32.xlu0 %v2002, 12
      %v2525 = vpop.permute.xlu0 %2524
      %2526 = vrot.lane.b32.xlu0 %v2084, 12
      %v2527 = vpop.permute.xlu0 %2526
      %2528 = vrot.lane.b32.xlu0 %v2005, 12
      %v2529 = vpop.permute.xlu0 %2528
      %2530 = vrot.lane.b32.xlu0 %v2085, 12
      %v2531 = vpop.permute.xlu0 %2530
      %2532 = vrot.lane.b32.xlu0 %v2008, 12
      %v2533 = vpop.permute.xlu0 %2532
      %2534 = vrot.lane.b32.xlu0 %v2086, 12
      %v2535 = vpop.permute.xlu0 %2534
      %2536 = vrot.lane.b32.xlu0 %v2011, 12
      %v2537 = vpop.permute.xlu0 %2536
      %2538 = vrot.lane.b32.xlu0 %v2087, 12
      %v2539 = vpop.permute.xlu0 %2538
      %2540 = vrot.lane.b32.xlu0 %v2014, 12
      %v2541 = vpop.permute.xlu0 %2540
      %2542 = vrot.lane.b32.xlu0 %v2088, 12
      %v2543 = vpop.permute.xlu0 %2542
      %2544 = vrot.lane.b32.xlu0 %v2017, 12
      %v2545 = vpop.permute.xlu0 %2544
      %2546 = vrot.lane.b32.xlu0 %v2089, 12
      %v2547 = vpop.permute.xlu0 %2546
      %2548 = vrot.lane.b32.xlu0 %v2020, 12
      %v2549 = vpop.permute.xlu0 %2548
      %2550 = vrot.lane.b32.xlu0 %v2090, 12
      %v2551 = vpop.permute.xlu0 %2550
      %2552 = vrot.lane.b32.xlu0 %v2023, 12
      %v2553 = vpop.permute.xlu0 %2552
      %2554 = vrot.lane.b32.xlu0 %v2091, 12
      %v2555 = vpop.permute.xlu0 %2554
      %2556 = vrot.lane.b32.xlu0 %v2026, 12
      %v2557 = vpop.permute.xlu0 %2556
      %2558 = vrot.lane.b32.xlu0 %v2092, 12
      %v2559 = vpop.permute.xlu0 %2558
      %2560 = vrot.lane.b32.xlu0 %v2029, 12
      %v2561 = vpop.permute.xlu0 %2560
      %2594 = vrot.lane.b32.xlu0 %v2150, 16
      %v2595 = vpop.permute.xlu0 %2594
      %2596 = vrot.lane.b32.xlu0 %v2152, 16
      %v2597 = vpop.permute.xlu0 %2596
      %2598 = vrot.lane.b32.xlu0 %v2155, 16
      %v2599 = vpop.permute.xlu0 %2598
      %2600 = vrot.lane.b32.xlu0 %v2157, 16
      %v2601 = vpop.permute.xlu0 %2600
      %2602 = vrot.lane.b32.xlu0 %v2160, 16
      %v2603 = vpop.permute.xlu0 %2602
      %2604 = vrot.lane.b32.xlu0 %v2162, 16
      %v2605 = vpop.permute.xlu0 %2604
      %2606 = vrot.lane.b32.xlu0 %v2165, 16
      %v2607 = vpop.permute.xlu0 %2606
      %2608 = vrot.lane.b32.xlu0 %v2167, 16
      %v2609 = vpop.permute.xlu0 %2608
      %2610 = vrot.lane.b32.xlu0 %v2170, 16
      %v2611 = vpop.permute.xlu0 %2610
      %2612 = vrot.lane.b32.xlu0 %v2172, 16
      %v2613 = vpop.permute.xlu0 %2612
      %2614 = vrot.lane.b32.xlu0 %v2175, 16
      %v2615 = vpop.permute.xlu0 %2614
      %2616 = vrot.lane.b32.xlu0 %v2177, 16
      %v2617 = vpop.permute.xlu0 %2616
      %2618 = vrot.lane.b32.xlu0 %v2180, 16
      %v2619 = vpop.permute.xlu0 %2618
      %2620 = vrot.lane.b32.xlu0 %v2182, 16
      %v2621 = vpop.permute.xlu0 %2620
      %2622 = vrot.lane.b32.xlu0 %v2185, 16
      %v2623 = vpop.permute.xlu0 %2622
      %2624 = vrot.lane.b32.xlu0 %v2187, 16
      %v2625 = vpop.permute.xlu0 %2624
      %2626 = vrot.lane.b32.xlu0 %v2190, 16
      %v2627 = vpop.permute.xlu0 %2626
      %2628 = vrot.lane.b32.xlu0 %v2192, 16
      %v2629 = vpop.permute.xlu0 %2628
      %2630 = vrot.lane.b32.xlu0 %v2195, 16
      %v2631 = vpop.permute.xlu0 %2630
      %2632 = vrot.lane.b32.xlu0 %v2197, 16
      %v2633 = vpop.permute.xlu0 %2632
      %2634 = vrot.lane.b32.xlu0 %v2200, 16
      %v2635 = vpop.permute.xlu0 %2634
      %2636 = vrot.lane.b32.xlu0 %v2202, 16
      %v2637 = vpop.permute.xlu0 %2636
      %2638 = vrot.lane.b32.xlu0 %v2205, 16
      %v2639 = vpop.permute.xlu0 %2638
      %2640 = vrot.lane.b32.xlu0 %v2207, 16
      %v2641 = vpop.permute.xlu0 %2640
      %2642 = vrot.lane.b32.xlu0 %v2210, 16
      %v2643 = vpop.permute.xlu0 %2642
      %2644 = vrot.lane.b32.xlu0 %v2212, 16
      %v2645 = vpop.permute.xlu0 %2644
      %2646 = vrot.lane.b32.xlu0 %v2215, 16
      %v2647 = vpop.permute.xlu0 %2646
      %2648 = vrot.lane.b32.xlu0 %v2217, 16
      %v2649 = vpop.permute.xlu0 %2648
      %2650 = vrot.lane.b32.xlu0 %v2220, 16
      %v2651 = vpop.permute.xlu0 %2650
      %2652 = vrot.lane.b32.xlu0 %v2222, 16
      %v2653 = vpop.permute.xlu0 %2652
      %2654 = vrot.lane.b32.xlu0 %v2304, 16
      %v2655 = vpop.permute.xlu0 %2654
      %2656 = vrot.lane.b32.xlu0 %v2306, 16
      %v2657 = vpop.permute.xlu0 %2656
      %2690 = vrot.lane.b32.xlu0 %v2227, 20
      %v2691 = vpop.permute.xlu0 %2690
      %2692 = vrot.lane.b32.xlu0 %v2229, 20
      %v2693 = vpop.permute.xlu0 %2692
      %2694 = vrot.lane.b32.xlu0 %v2232, 20
      %v2695 = vpop.permute.xlu0 %2694
      %2696 = vrot.lane.b32.xlu0 %v2234, 20
      %v2697 = vpop.permute.xlu0 %2696
      %2698 = vrot.lane.b32.xlu0 %v2237, 20
      %v2699 = vpop.permute.xlu0 %2698
      %2700 = vrot.lane.b32.xlu0 %v2239, 20
      %v2701 = vpop.permute.xlu0 %2700
      %2702 = vrot.lane.b32.xlu0 %v2242, 20
      %v2703 = vpop.permute.xlu0 %2702
      %2704 = vrot.lane.b32.xlu0 %v2244, 20
      %v2705 = vpop.permute.xlu0 %2704
      %2706 = vrot.lane.b32.xlu0 %v2247, 20
      %v2707 = vpop.permute.xlu0 %2706
      %2708 = vrot.lane.b32.xlu0 %v2249, 20
      %v2709 = vpop.permute.xlu0 %2708
      %2710 = vrot.lane.b32.xlu0 %v2252, 20
      %v2711 = vpop.permute.xlu0 %2710
      %2712 = vrot.lane.b32.xlu0 %v2254, 20
      %v2713 = vpop.permute.xlu0 %2712
      %2714 = vrot.lane.b32.xlu0 %v2257, 20
      %v2715 = vpop.permute.xlu0 %2714
      %2716 = vrot.lane.b32.xlu0 %v2259, 20
      %v2717 = vpop.permute.xlu0 %2716
      %2718 = vrot.lane.b32.xlu0 %v2262, 20
      %v2719 = vpop.permute.xlu0 %2718
      %2720 = vrot.lane.b32.xlu0 %v2264, 20
      %v2721 = vpop.permute.xlu0 %2720
      %2722 = vrot.lane.b32.xlu0 %v2267, 20
      %v2723 = vpop.permute.xlu0 %2722
      %2724 = vrot.lane.b32.xlu0 %v2269, 20
      %v2725 = vpop.permute.xlu0 %2724
      %2726 = vrot.lane.b32.xlu0 %v2272, 20
      %v2727 = vpop.permute.xlu0 %2726
      %2728 = vrot.lane.b32.xlu0 %v2274, 20
      %v2729 = vpop.permute.xlu0 %2728
      %2730 = vrot.lane.b32.xlu0 %v2277, 20
      %v2731 = vpop.permute.xlu0 %2730
      %2732 = vrot.lane.b32.xlu0 %v2279, 20
      %v2733 = vpop.permute.xlu0 %2732
      %2734 = vrot.lane.b32.xlu0 %v2282, 20
      %v2735 = vpop.permute.xlu0 %2734
      %2736 = vrot.lane.b32.xlu0 %v2284, 20
      %v2737 = vpop.permute.xlu0 %2736
      %2738 = vrot.lane.b32.xlu0 %v2287, 20
      %v2739 = vpop.permute.xlu0 %2738
      %2740 = vrot.lane.b32.xlu0 %v2289, 20
      %v2741 = vpop.permute.xlu0 %2740
      %2742 = vrot.lane.b32.xlu0 %v2292, 20
      %v2743 = vpop.permute.xlu0 %2742
      %2744 = vrot.lane.b32.xlu0 %v2294, 20
      %v2745 = vpop.permute.xlu0 %2744
      %2746 = vrot.lane.b32.xlu0 %v2297, 20
      %v2747 = vpop.permute.xlu0 %2746
      %2748 = vrot.lane.b32.xlu0 %v2299, 20
      %v2749 = vpop.permute.xlu0 %2748
      %2750 = vrot.lane.b32.xlu0 %v2309, 20
      %v2751 = vpop.permute.xlu0 %2750
      %2752 = vrot.lane.b32.xlu0 %v2311, 20
      %v2753 = vpop.permute.xlu0 %2752
      %2786 = vrot.lane.b32.xlu0 %v2078, 24
      %v2787 = vpop.permute.xlu0 %2786
      %2788 = vrot.lane.b32.xlu0 %v1987, 24
      %v2789 = vpop.permute.xlu0 %2788
      %2790 = vrot.lane.b32.xlu0 %v2079, 24
      %v2791 = vpop.permute.xlu0 %2790
      %2792 = vrot.lane.b32.xlu0 %v1990, 24
      %v2793 = vpop.permute.xlu0 %2792
      %2794 = vrot.lane.b32.xlu0 %v2080, 24
      %v2795 = vpop.permute.xlu0 %2794
      %2796 = vrot.lane.b32.xlu0 %v1993, 24
      %v2797 = vpop.permute.xlu0 %2796
      %2798 = vrot.lane.b32.xlu0 %v2081, 24
      %v2799 = vpop.permute.xlu0 %2798
      %2800 = vrot.lane.b32.xlu0 %v1996, 24
      %v2801 = vpop.permute.xlu0 %2800
      %2802 = vrot.lane.b32.xlu0 %v2082, 24
      %v2803 = vpop.permute.xlu0 %2802
      %2804 = vrot.lane.b32.xlu0 %v1999, 24
      %v2805 = vpop.permute.xlu0 %2804
      %2806 = vrot.lane.b32.xlu0 %v2083, 24
      %v2807 = vpop.permute.xlu0 %2806
      %2808 = vrot.lane.b32.xlu0 %v2002, 24
      %v2809 = vpop.permute.xlu0 %2808
      %2810 = vrot.lane.b32.xlu0 %v2084, 24
      %v2811 = vpop.permute.xlu0 %2810
      %2812 = vrot.lane.b32.xlu0 %v2005, 24
      %v2813 = vpop.permute.xlu0 %2812
      %2814 = vrot.lane.b32.xlu0 %v2085, 24
      %v2815 = vpop.permute.xlu0 %2814
      %2816 = vrot.lane.b32.xlu0 %v2008, 24
      %v2817 = vpop.permute.xlu0 %2816
      %2818 = vrot.lane.b32.xlu0 %v2086, 24
      %v2819 = vpop.permute.xlu0 %2818
      %2820 = vrot.lane.b32.xlu0 %v2011, 24
      %v2821 = vpop.permute.xlu0 %2820
      %2822 = vrot.lane.b32.xlu0 %v2087, 24
      %v2823 = vpop.permute.xlu0 %2822
      %2824 = vrot.lane.b32.xlu0 %v2014, 24
      %v2825 = vpop.permute.xlu0 %2824
      %2826 = vrot.lane.b32.xlu0 %v2088, 24
      %v2827 = vpop.permute.xlu0 %2826
      %2828 = vrot.lane.b32.xlu0 %v2017, 24
      %v2829 = vpop.permute.xlu0 %2828
      %2830 = vrot.lane.b32.xlu0 %v2089, 24
      %v2831 = vpop.permute.xlu0 %2830
      %2832 = vrot.lane.b32.xlu0 %v2020, 24
      %v2833 = vpop.permute.xlu0 %2832
      %2834 = vrot.lane.b32.xlu0 %v2090, 24
      %v2835 = vpop.permute.xlu0 %2834
      %2836 = vrot.lane.b32.xlu0 %v2023, 24
      %v2837 = vpop.permute.xlu0 %2836
      %2838 = vrot.lane.b32.xlu0 %v2091, 24
      %v2839 = vpop.permute.xlu0 %2838
      %2840 = vrot.lane.b32.xlu0 %v2026, 24
      %v2841 = vpop.permute.xlu0 %2840
      %2842 = vrot.lane.b32.xlu0 %v2092, 24
      %v2843 = vpop.permute.xlu0 %2842
      %2844 = vrot.lane.b32.xlu0 %v2029, 24
      %v2845 = vpop.permute.xlu0 %2844
      %2846 = vrot.lane.b32.xlu0 0.0, 24
      %v2847 = vpop.permute.xlu0 %2846
      %2879 = vrot.lane.b32.xlu0 %v2155, 28
      %v2880 = vpop.permute.xlu0 %2879
      %2881 = vrot.lane.b32.xlu0 %v2157, 28
      %v2882 = vpop.permute.xlu0 %2881
      %2883 = vrot.lane.b32.xlu0 %v2160, 28
      %v2884 = vpop.permute.xlu0 %2883
      %2885 = vrot.lane.b32.xlu0 %v2162, 28
      %v2886 = vpop.permute.xlu0 %2885
      %2887 = vrot.lane.b32.xlu0 %v2165, 28
      %v2888 = vpop.permute.xlu0 %2887
      %2889 = vrot.lane.b32.xlu0 %v2167, 28
      %v2890 = vpop.permute.xlu0 %2889
      %2891 = vrot.lane.b32.xlu0 %v2170, 28
      %v2892 = vpop.permute.xlu0 %2891
      %2893 = vrot.lane.b32.xlu0 %v2172, 28
      %v2894 = vpop.permute.xlu0 %2893
      %2895 = vrot.lane.b32.xlu0 %v2175, 28
      %v2896 = vpop.permute.xlu0 %2895
      %2897 = vrot.lane.b32.xlu0 %v2177, 28
      %v2898 = vpop.permute.xlu0 %2897
      %2899 = vrot.lane.b32.xlu0 %v2180, 28
      %v2900 = vpop.permute.xlu0 %2899
      %2901 = vrot.lane.b32.xlu0 %v2182, 28
      %v2902 = vpop.permute.xlu0 %2901
      %2903 = vrot.lane.b32.xlu0 %v2185, 28
      %v2904 = vpop.permute.xlu0 %2903
      %2905 = vrot.lane.b32.xlu0 %v2187, 28
      %v2906 = vpop.permute.xlu0 %2905
      %2907 = vrot.lane.b32.xlu0 %v2190, 28
      %v2908 = vpop.permute.xlu0 %2907
      %2909 = vrot.lane.b32.xlu0 %v2192, 28
      %v2910 = vpop.permute.xlu0 %2909
      %2911 = vrot.lane.b32.xlu0 %v2195, 28
      %v2912 = vpop.permute.xlu0 %2911
      %2913 = vrot.lane.b32.xlu0 %v2197, 28
      %v2914 = vpop.permute.xlu0 %2913
      %2915 = vrot.lane.b32.xlu0 %v2200, 28
      %v2916 = vpop.permute.xlu0 %2915
      %2917 = vrot.lane.b32.xlu0 %v2202, 28
      %v2918 = vpop.permute.xlu0 %2917
      %2919 = vrot.lane.b32.xlu0 %v2205, 28
      %v2920 = vpop.permute.xlu0 %2919
      %2921 = vrot.lane.b32.xlu0 %v2207, 28
      %v2922 = vpop.permute.xlu0 %2921
      %2923 = vrot.lane.b32.xlu0 %v2210, 28
      %v2924 = vpop.permute.xlu0 %2923
      %2925 = vrot.lane.b32.xlu0 %v2212, 28
      %v2926 = vpop.permute.xlu0 %2925
      %2927 = vrot.lane.b32.xlu0 %v2215, 28
      %v2928 = vpop.permute.xlu0 %2927
      %2929 = vrot.lane.b32.xlu0 %v2217, 28
      %v2930 = vpop.permute.xlu0 %2929
      %2931 = vrot.lane.b32.xlu0 %v2220, 28
      %v2932 = vpop.permute.xlu0 %2931
      %2933 = vrot.lane.b32.xlu0 %v2222, 28
      %v2934 = vpop.permute.xlu0 %2933
      %2935 = vrot.lane.b32.xlu0 %v2304, 28
      %v2936 = vpop.permute.xlu0 %2935
      %2937 = vrot.lane.b32.xlu0 %v2306, 28
      %v2938 = vpop.permute.xlu0 %2937
      %2939 = vrot.lane.b32.xlu0 %v2147, 28
      %v2940 = vpop.permute.xlu0 %2939
      %2972 = vrot.lane.b32.xlu0 %v2232, 32
      %v2973 = vpop.permute.xlu0 %2972
      %2974 = vrot.lane.b32.xlu0 %v2234, 32
      %v2975 = vpop.permute.xlu0 %2974
      %2976 = vrot.lane.b32.xlu0 %v2237, 32
      %v2977 = vpop.permute.xlu0 %2976
      %2978 = vrot.lane.b32.xlu0 %v2239, 32
      %v2979 = vpop.permute.xlu0 %2978
      %2980 = vrot.lane.b32.xlu0 %v2242, 32
      %v2981 = vpop.permute.xlu0 %2980
      %2982 = vrot.lane.b32.xlu0 %v2244, 32
      %v2983 = vpop.permute.xlu0 %2982
      %2984 = vrot.lane.b32.xlu0 %v2247, 32
      %v2985 = vpop.permute.xlu0 %2984
      %2986 = vrot.lane.b32.xlu0 %v2249, 32
      %v2987 = vpop.permute.xlu0 %2986
      %2988 = vrot.lane.b32.xlu0 %v2252, 32
      %v2989 = vpop.permute.xlu0 %2988
      %2990 = vrot.lane.b32.xlu0 %v2254, 32
      %v2991 = vpop.permute.xlu0 %2990
      %2992 = vrot.lane.b32.xlu0 %v2257, 32
      %v2993 = vpop.permute.xlu0 %2992
      %2994 = vrot.lane.b32.xlu0 %v2259, 32
      %v2995 = vpop.permute.xlu0 %2994
      %2996 = vrot.lane.b32.xlu0 %v2262, 32
      %v2997 = vpop.permute.xlu0 %2996
      %2998 = vrot.lane.b32.xlu0 %v2264, 32
      %v2999 = vpop.permute.xlu0 %2998
      %3000 = vrot.lane.b32.xlu0 %v2267, 32
      %v3001 = vpop.permute.xlu0 %3000
      %3002 = vrot.lane.b32.xlu0 %v2269, 32
      %v3003 = vpop.permute.xlu0 %3002
      %3004 = vrot.lane.b32.xlu0 %v2272, 32
      %v3005 = vpop.permute.xlu0 %3004
      %3006 = vrot.lane.b32.xlu0 %v2274, 32
      %v3007 = vpop.permute.xlu0 %3006
      %3008 = vrot.lane.b32.xlu0 %v2277, 32
      %v3009 = vpop.permute.xlu0 %3008
      %3010 = vrot.lane.b32.xlu0 %v2279, 32
      %v3011 = vpop.permute.xlu0 %3010
      %3012 = vrot.lane.b32.xlu0 %v2282, 32
      %v3013 = vpop.permute.xlu0 %3012
      %3014 = vrot.lane.b32.xlu0 %v2284, 32
      %v3015 = vpop.permute.xlu0 %3014
      %3016 = vrot.lane.b32.xlu0 %v2287, 32
      %v3017 = vpop.permute.xlu0 %3016
      %3018 = vrot.lane.b32.xlu0 %v2289, 32
      %v3019 = vpop.permute.xlu0 %3018
      %3020 = vrot.lane.b32.xlu0 %v2292, 32
      %v3021 = vpop.permute.xlu0 %3020
      %3022 = vrot.lane.b32.xlu0 %v2294, 32
      %v3023 = vpop.permute.xlu0 %3022
      %3024 = vrot.lane.b32.xlu0 %v2297, 32
      %v3025 = vpop.permute.xlu0 %3024
      %3026 = vrot.lane.b32.xlu0 %v2299, 32
      %v3027 = vpop.permute.xlu0 %3026
      %3028 = vrot.lane.b32.xlu0 %v2309, 32
      %v3029 = vpop.permute.xlu0 %3028
      %3030 = vrot.lane.b32.xlu0 %v2311, 32
      %v3031 = vpop.permute.xlu0 %3030
      %3032 = vrot.lane.b32.xlu0 %v2224, 32
      %v3033 = vpop.permute.xlu0 %3032
      %v3065 = vsel %vm1321, 0.0, %v2313
      %v3066 = vsel %vm1321, %v2077, %v2315
      %v3067 = vsel %vm1321, %v1984, %v2317
      %v3068 = vsel %vm1321, %v2078, %v2319
      %v3069 = vsel %vm1321, %v1987, %v2321
      %v3070 = vsel %vm1321, %v2079, %v2323
      %v3071 = vsel %vm1321, %v1990, %v2325
      %v3072 = vsel %vm1321, %v2080, %v2327
      %v3073 = vsel %vm1321, %v1993, %v2329
      %v3074 = vsel %vm1321, %v2081, %v2331
      %v3075 = vsel %vm1321, %v1996, %v2333
      %v3076 = vsel %vm1321, %v2082, %v2335
      %v3077 = vsel %vm1321, %v1999, %v2337
      %v3078 = vsel %vm1321, %v2083, %v2339
      %v3079 = vsel %vm1321, %v2002, %v2341
      %v3080 = vsel %vm1321, %v2084, %v2343
      %v3081 = vsel %vm1321, %v2005, %v2345
      %v3082 = vsel %vm1321, %v2085, %v2347
      %v3083 = vsel %vm1321, %v2008, %v2349
      %v3084 = vsel %vm1321, %v2086, %v2351
      %v3085 = vsel %vm1321, %v2011, %v2353
      %v3086 = vsel %vm1321, %v2087, %v2355
      %v3087 = vsel %vm1321, %v2014, %v2357
      %v3088 = vsel %vm1321, %v2088, %v2359
      %v3089 = vsel %vm1321, %v2017, %v2361
      %v3090 = vsel %vm1321, %v2089, %v2363
      %v3091 = vsel %vm1321, %v2020, %v2365
      %v3092 = vsel %vm1321, %v2090, %v2367
      %v3093 = vsel %vm1321, %v2023, %v2369
      %v3094 = vsel %vm1321, %v2091, %v2371
      %v3095 = vsel %vm1321, %v2026, %v2373
      %v3096 = vsel %vm1354, %v3065, %v2406
      %v3097 = vsel %vm1354, %v3066, %v2408
      %v3098 = vsel %vm1354, %v3067, %v2410
      %v3099 = vsel %vm1354, %v3068, %v2412
      %v3100 = vsel %vm1354, %v3069, %v2414
      %v3101 = vsel %vm1354, %v3070, %v2416
      %v3102 = vsel %vm1354, %v3071, %v2418
      %v3103 = vsel %vm1354, %v3072, %v2420
      %v3104 = vsel %vm1354, %v3073, %v2422
      %v3105 = vsel %vm1354, %v3074, %v2424
      %v3106 = vsel %vm1354, %v3075, %v2426
      %v3107 = vsel %vm1354, %v3076, %v2428
      %v3108 = vsel %vm1354, %v3077, %v2430
      %v3109 = vsel %vm1354, %v3078, %v2432
      %v3110 = vsel %vm1354, %v3079, %v2434
      %v3111 = vsel %vm1354, %v3080, %v2436
      %v3112 = vsel %vm1354, %v3081, %v2438
      %v3113 = vsel %vm1354, %v3082, %v2440
      %v3114 = vsel %vm1354, %v3083, %v2442
      %v3115 = vsel %vm1354, %v3084, %v2444
      %v3116 = vsel %vm1354, %v3085, %v2446
      %v3117 = vsel %vm1354, %v3086, %v2448
      %v3118 = vsel %vm1354, %v3087, %v2450
      %v3119 = vsel %vm1354, %v3088, %v2452
      %v3120 = vsel %vm1354, %v3089, %v2454
      %v3121 = vsel %vm1354, %v3090, %v2456
      %v3122 = vsel %vm1354, %v3091, %v2458
      %v3123 = vsel %vm1354, %v3092, %v2460
      %v3124 = vsel %vm1354, %v3093, %v2462
      %v3125 = vsel %vm1354, %v3094, %v2464
      %v3126 = vsel %vm1354, %v3095, %v2466
      %v3127 = vsel %vm1387, %v3096, %v2499
      %v3128 = vsel %vm1387, %v3096, %v2501
      %v3129 = vsel %vm1387, %v3097, %v2503
      %v3130 = vsel %vm1387, %v3098, %v2505
      %v3131 = vsel %vm1387, %v3099, %v2507
      %v3132 = vsel %vm1387, %v3100, %v2509
      %v3133 = vsel %vm1387, %v3101, %v2511
      %v3134 = vsel %vm1387, %v3102, %v2513
      %v3135 = vsel %vm1387, %v3103, %v2515
      %v3136 = vsel %vm1387, %v3104, %v2517
      %v3137 = vsel %vm1387, %v3105, %v2519
      %v3138 = vsel %vm1387, %v3106, %v2521
      %v3139 = vsel %vm1387, %v3107, %v2523
      %v3140 = vsel %vm1387, %v3108, %v2525
      %v3141 = vsel %vm1387, %v3109, %v2527
      %v3142 = vsel %vm1387, %v3110, %v2529
      %v3143 = vsel %vm1387, %v3111, %v2531
      %v3144 = vsel %vm1387, %v3112, %v2533
      %v3145 = vsel %vm1387, %v3113, %v2535
      %v3146 = vsel %vm1387, %v3114, %v2537
      %v3147 = vsel %vm1387, %v3115, %v2539
      %v3148 = vsel %vm1387, %v3116, %v2541
      %v3149 = vsel %vm1387, %v3117, %v2543
      %v3150 = vsel %vm1387, %v3118, %v2545
      %v3151 = vsel %vm1387, %v3119, %v2547
      %v3152 = vsel %vm1387, %v3120, %v2549
      %v3153 = vsel %vm1387, %v3121, %v2551
      %v3154 = vsel %vm1387, %v3122, %v2553
      %v3155 = vsel %vm1387, %v3123, %v2555
      %v3156 = vsel %vm1387, %v3124, %v2557
      %v3157 = vsel %vm1387, %v3125, %v2559
      %v3158 = vsel %vm1387, %v3126, %v2561
      %v3159 = vsel %vm1420, %v3127, %v2595
      %v3160 = vsel %vm1420, %v3128, %v2597
      %v3161 = vsel %vm1420, %v3129, %v2599
      %v3162 = vsel %vm1420, %v3130, %v2601
      %v3163 = vsel %vm1420, %v3131, %v2603
      %v3164 = vsel %vm1420, %v3132, %v2605
      %v3165 = vsel %vm1420, %v3133, %v2607
      %v3166 = vsel %vm1420, %v3134, %v2609
      %v3167 = vsel %vm1420, %v3135, %v2611
      %v3168 = vsel %vm1420, %v3136, %v2613
      %v3169 = vsel %vm1420, %v3137, %v2615
      %v3170 = vsel %vm1420, %v3138, %v2617
      %v3171 = vsel %vm1420, %v3139, %v2619
      %v3172 = vsel %vm1420, %v3140, %v2621
      %v3173 = vsel %vm1420, %v3141, %v2623
      %v3174 = vsel %vm1420, %v3142, %v2625
      %v3175 = vsel %vm1420, %v3143, %v2627
      %v3176 = vsel %vm1420, %v3144, %v2629
      %v3177 = vsel %vm1420, %v3145, %v2631
      %v3178 = vsel %vm1420, %v3146, %v2633
      %v3179 = vsel %vm1420, %v3147, %v2635
      %v3180 = vsel %vm1420, %v3148, %v2637
      %v3181 = vsel %vm1420, %v3149, %v2639
      %v3182 = vsel %vm1420, %v3150, %v2641
      %v3183 = vsel %vm1420, %v3151, %v2643
      %v3184 = vsel %vm1420, %v3152, %v2645
      %v3185 = vsel %vm1420, %v3153, %v2647
      %v3186 = vsel %vm1420, %v3154, %v2649
      %v3187 = vsel %vm1420, %v3155, %v2651
      %v3188 = vsel %vm1420, %v3156, %v2653
      %v3189 = vsel %vm1420, %v3157, %v2655
      %v3190 = vsel %vm1420, %v3158, %v2657
      %v3191 = vsel %vm1453, %v3159, %v2691
      %v3192 = vsel %vm1453, %v3160, %v2693
      %v3193 = vsel %vm1453, %v3161, %v2695
      %v3194 = vsel %vm1453, %v3162, %v2697
      %v3195 = vsel %vm1453, %v3163, %v2699
      %v3196 = vsel %vm1453, %v3164, %v2701
      %v3197 = vsel %vm1453, %v3165, %v2703
      %v3198 = vsel %vm1453, %v3166, %v2705
      %v3199 = vsel %vm1453, %v3167, %v2707
      %v3200 = vsel %vm1453, %v3168, %v2709
      %v3201 = vsel %vm1453, %v3169, %v2711
      %v3202 = vsel %vm1453, %v3170, %v2713
      %v3203 = vsel %vm1453, %v3171, %v2715
      %v3204 = vsel %vm1453, %v3172, %v2717
      %v3205 = vsel %vm1453, %v3173, %v2719
      %v3206 = vsel %vm1453, %v3174, %v2721
      %v3207 = vsel %vm1453, %v3175, %v2723
      %v3208 = vsel %vm1453, %v3176, %v2725
      %v3209 = vsel %vm1453, %v3177, %v2727
      %v3210 = vsel %vm1453, %v3178, %v2729
      %v3211 = vsel %vm1453, %v3179, %v2731
      %v3212 = vsel %vm1453, %v3180, %v2733
      %v3213 = vsel %vm1453, %v3181, %v2735
      %v3214 = vsel %vm1453, %v3182, %v2737
      %v3215 = vsel %vm1453, %v3183, %v2739
      %v3216 = vsel %vm1453, %v3184, %v2741
      %v3217 = vsel %vm1453, %v3185, %v2743
      %v3218 = vsel %vm1453, %v3186, %v2745
      %v3219 = vsel %vm1453, %v3187, %v2747
      %v3220 = vsel %vm1453, %v3188, %v2749
      %v3221 = vsel %vm1453, %v3189, %v2751
      %v3222 = vsel %vm1453, %v3190, %v2753
      %v3223 = vsel %vm1486, %v3191, %v2787
      %v3224 = vsel %vm1486, %v3192, %v2789
      %v3225 = vsel %vm1486, %v3193, %v2791
      %v3226 = vsel %vm1486, %v3194, %v2793
      %v3227 = vsel %vm1486, %v3195, %v2795
      %v3228 = vsel %vm1486, %v3196, %v2797
      %v3229 = vsel %vm1486, %v3197, %v2799
      %v3230 = vsel %vm1486, %v3198, %v2801
      %v3231 = vsel %vm1486, %v3199, %v2803
      %v3232 = vsel %vm1486, %v3200, %v2805
      %v3233 = vsel %vm1486, %v3201, %v2807
      %v3234 = vsel %vm1486, %v3202, %v2809
      %v3235 = vsel %vm1486, %v3203, %v2811
      %v3236 = vsel %vm1486, %v3204, %v2813
      %v3237 = vsel %vm1486, %v3205, %v2815
      %v3238 = vsel %vm1486, %v3206, %v2817
      %v3239 = vsel %vm1486, %v3207, %v2819
      %v3240 = vsel %vm1486, %v3208, %v2821
      %v3241 = vsel %vm1486, %v3209, %v2823
      %v3242 = vsel %vm1486, %v3210, %v2825
      %v3243 = vsel %vm1486, %v3211, %v2827
      %v3244 = vsel %vm1486, %v3212, %v2829
      %v3245 = vsel %vm1486, %v3213, %v2831
      %v3246 = vsel %vm1486, %v3214, %v2833
      %v3247 = vsel %vm1486, %v3215, %v2835
      %v3248 = vsel %vm1486, %v3216, %v2837
      %v3249 = vsel %vm1486, %v3217, %v2839
      %v3250 = vsel %vm1486, %v3218, %v2841
      %v3251 = vsel %vm1486, %v3219, %v2843
      %v3252 = vsel %vm1486, %v3220, %v2845
      %v3253 = vsel %vm1486, %v3221, %v2847
      %v3254 = vsel %vm1486, %v3222, %v2847
      %v3255 = vsel %vm1519, %v3223, %v2880
      %v3256 = vsel %vm1519, %v3224, %v2882
      %v3257 = vsel %vm1519, %v3225, %v2884
      %v3258 = vsel %vm1519, %v3226, %v2886
      %v3259 = vsel %vm1519, %v3227, %v2888
      %v3260 = vsel %vm1519, %v3228, %v2890
      %v3261 = vsel %vm1519, %v3229, %v2892
      %v3262 = vsel %vm1519, %v3230, %v2894
      %v3263 = vsel %vm1519, %v3231, %v2896
      %v3264 = vsel %vm1519, %v3232, %v2898
      %v3265 = vsel %vm1519, %v3233, %v2900
      %v3266 = vsel %vm1519, %v3234, %v2902
      %v3267 = vsel %vm1519, %v3235, %v2904
      %v3268 = vsel %vm1519, %v3236, %v2906
      %v3269 = vsel %vm1519, %v3237, %v2908
      %v3270 = vsel %vm1519, %v3238, %v2910
      %v3271 = vsel %vm1519, %v3239, %v2912
      %v3272 = vsel %vm1519, %v3240, %v2914
      %v3273 = vsel %vm1519, %v3241, %v2916
      %v3274 = vsel %vm1519, %v3242, %v2918
      %v3275 = vsel %vm1519, %v3243, %v2920
      %v3276 = vsel %vm1519, %v3244, %v2922
      %v3277 = vsel %vm1519, %v3245, %v2924
      %v3278 = vsel %vm1519, %v3246, %v2926
      %v3279 = vsel %vm1519, %v3247, %v2928
      %v3280 = vsel %vm1519, %v3248, %v2930
      %v3281 = vsel %vm1519, %v3249, %v2932
      %v3282 = vsel %vm1519, %v3250, %v2934
      %v3283 = vsel %vm1519, %v3251, %v2936
      %v3284 = vsel %vm1519, %v3252, %v2938
      %v3285 = vsel %vm1519, %v3253, %v2940
      %v3286 = vsel %vm1519, %v3254, %v2940
      %v3287 = vsel %vm1552, %v3255, %v2973
      %v3288 = vsel %vm1552, %v3256, %v2975
      %v3289 = vsel %vm1552, %v3257, %v2977
      %v3290 = vsel %vm1552, %v3258, %v2979
      %v3291 = vsel %vm1552, %v3259, %v2981
      %v3292 = vsel %vm1552, %v3260, %v2983
      %v3293 = vsel %vm1552, %v3261, %v2985
      %v3294 = vsel %vm1552, %v3262, %v2987
      %v3295 = vsel %vm1552, %v3263, %v2989
      %v3296 = vsel %vm1552, %v3264, %v2991
      %v3297 = vsel %vm1552, %v3265, %v2993
      %v3298 = vsel %vm1552, %v3266, %v2995
      %v3299 = vsel %vm1552, %v3267, %v2997
      %v3300 = vsel %vm1552, %v3268, %v2999
      %v3301 = vsel %vm1552, %v3269, %v3001
      %v3302 = vsel %vm1552, %v3270, %v3003
      %v3303 = vsel %vm1552, %v3271, %v3005
      %v3304 = vsel %vm1552, %v3272, %v3007
      %v3305 = vsel %vm1552, %v3273, %v3009
      %v3306 = vsel %vm1552, %v3274, %v3011
      %v3307 = vsel %vm1552, %v3275, %v3013
      %v3308 = vsel %vm1552, %v3276, %v3015
      %v3309 = vsel %vm1552, %v3277, %v3017
      %v3310 = vsel %vm1552, %v3278, %v3019
      %v3311 = vsel %vm1552, %v3279, %v3021
      %v3312 = vsel %vm1552, %v3280, %v3023
      %v3313 = vsel %vm1552, %v3281, %v3025
      %v3314 = vsel %vm1552, %v3282, %v3027
      %v3315 = vsel %vm1552, %v3283, %v3029
      %v3316 = vsel %vm1552, %v3284, %v3031
      %v3317 = vsel %vm1552, %v3285, %v3033
      %v3318 = vsel %vm1552, %v3286, %v3033
      %v3320 = vlaneseq
      %v3321 = vshrl.u32 %v3320, 7
      %v3322 = vsub.s32 0, %v3321
      %v3323 = vrot.slane %v2114, %v3322
      %v3326 = vsel %vm1591, %v3287, 0
      %v3329 = vsel %vm1591, %v3288, 0
      %v3332 = vsel %vm1591, %v3289, 0
      %v3335 = vsel %vm1591, %v3290, 0
      %v3338 = vsel %vm1591, %v3291, 0
      %v3341 = vsel %vm1591, %v3292, 0
      %v3344 = vsel %vm1591, %v3293, 0
      %v3347 = vsel %vm1591, %v3294, 0
      %v3350 = vsel %vm1591, %v3295, 0
      %v3353 = vsel %vm1591, %v3296, 0
      %v3356 = vsel %vm1591, %v3297, 0
      %v3359 = vsel %vm1591, %v3298, 0
      %v3362 = vsel %vm1591, %v3299, 0
      %v3365 = vsel %vm1591, %v3300, 0
      %v3368 = vsel %vm1591, %v3301, 0
      %v3371 = vsel %vm1591, %v3302, 0
      %v3374 = vsel %vm1591, %v3303, 0
      %v3377 = vsel %vm1591, %v3304, 0
      %v3380 = vsel %vm1591, %v3305, 0
      %v3383 = vsel %vm1591, %v3306, 0
      %v3386 = vsel %vm1591, %v3307, 0
      %v3389 = vsel %vm1591, %v3308, 0
      %v3392 = vsel %vm1591, %v3309, 0
      %v3395 = vsel %vm1591, %v3310, 0
      %v3398 = vsel %vm1591, %v3311, 0
      %v3401 = vsel %vm1591, %v3312, 0
      %v3404 = vsel %vm1591, %v3313, 0
      %v3407 = vsel %vm1591, %v3314, 0
      %v3410 = vsel %vm1591, %v3315, 0
      %v3413 = vsel %vm1591, %v3316, 0
      %v3416 = vsel %vm1591, %v3317, 0
      %v3419 = vsel %vm1591, %v3318, 0
      %v3422 = vsel %vm1688, %v2113, 0
      %3424 = vmatprep.subr.mxu0 0.0
      %3425 = vmatpush1.msra.mxu0 0.0
      %3426 = vmatprep.subr.mxu0 0.0
      %3427 = vmatpush1.msra.mxu0 0.0
      %3428 = vmatprep.subr.mxu0 0.0
      %3429 = vmatpush1.msra.mxu0 0.0
      %3430 = vmatprep.subr.mxu0 0.0
      %3431 = vmatpush1.msra.mxu0 0.0
      %3432 = vmatprep.subr.mxu0 0.0
      %3433 = vmatpush1.msra.mxu0 0.0
      %3434 = vmatprep.subr.mxu0 0.0
      %3435 = vmatpush1.msra.mxu0 0.0
      %3436 = vmatprep.subr.mxu0 0.0
      %3437 = vmatpush1.msra.mxu0 0.0
      %3438 = vmatprep.subr.mxu0 0.0
      %3439 = vmatpush1.msra.mxu0 0.0
      %3440 = vmatprep.subr.mxu0 0.0
      %3441 = vmatpush1.msra.mxu0 0.0
      %3442 = vmatprep.subr.mxu0 0.0
      %3443 = vmatpush1.msra.mxu0 0.0
      %3444 = vmatprep.subr.mxu0 0.0
      %3445 = vmatpush1.msra.mxu0 0.0
      %3446 = vmatprep.subr.mxu0 0.0
      %3447 = vmatpush1.msra.mxu0 %v3422
      %3448 = vmatprep.subr.mxu0 0.0
      %3449 = vmatpush1.msra.mxu0 %v2112
      %3450 = vmatprep.subr.mxu0 0.0
      %3451 = vmatpush1.msra.mxu0 %v2111
      %3452 = vmatprep.subr.mxu0 0.0
      %3453 = vmatpush1.msra.mxu0 %v2110
      %3454 = vmatprep.subr.mxu0 0.0
      %3455 = vmatpush1.msra.mxu0 %v2109
      %3456 = vmatprep.subr.mxu0 0.0
      %3457 = vmatpush2.msra.mxu0 0.0
      %3458 = vmatprep.subr.mxu0 0.0
      %3459 = vmatpush2.msra.mxu0 0.0
      %3460 = vmatprep.subr.mxu0 0.0
      %3461 = vmatpush2.msra.mxu0 0.0
      %3462 = vmatprep.subr.mxu0 0.0
      %3463 = vmatpush2.msra.mxu0 0.0
      %3464 = vmatprep.subr.mxu0 0.0
      %3465 = vmatpush2.msra.mxu0 0.0
      %3466 = vmatprep.subr.mxu0 0.0
      %3467 = vmatpush2.msra.mxu0 0.0
      %3468 = vmatprep.subr.mxu0 0.0
      %3469 = vmatpush2.msra.mxu0 0.0
      %3470 = vmatprep.subr.mxu0 0.0
      %3471 = vmatpush2.msra.mxu0 0.0
      %3472 = vmatprep.subr.mxu0 0.0
      %3473 = vmatpush2.msra.mxu0 0.0
      %3474 = vmatprep.subr.mxu0 0.0
      %3475 = vmatpush2.msra.mxu0 0.0
      %3476 = vmatprep.subr.mxu0 0.0
      %3477 = vmatpush2.msra.mxu0 0.0
      %3478 = vmatprep.subr.mxu0 0.0
      %3479 = vmatpush2.msra.mxu0 0.0
      %3480 = vmatprep.subr.mxu0 0.0
      %3481 = vmatpush2.msra.mxu0 0.0
      %3482 = vmatprep.subr.mxu0 0.0
      %3483 = vmatpush2.msra.mxu0 0.0
      %3484 = vmatprep.subr.mxu0 0.0
      %3485 = vmatpush2.msra.mxu0 0.0
      %3486 = vmatprep.subr.mxu0 0.0
      %3487 = vmatpush2.msra.mxu0 0.0
      %3488 = vmatprep.mubr.f32.mxu0 0.0
      %3489 = vmatmul.mubr.f32.gmra.mxu0 %v3326
      %v3490 = vpop.f32.mrf.mxu0
      %v3491 = vadd.f32 %v3323, %v3490
      %v3492 = vpop.f32.mrf.mxu0
      %3493 = vmatprep.mubr.f32.mxu0 0.0
      %3494 = vmatmul.mubr.f32.gmra.mxu0 %v3329
      %v3495 = vpop.f32.mrf.mxu0
      %v3496 = vadd.f32 %v3323, %v3495
      %v3497 = vpop.f32.mrf.mxu0
      %3498 = vmatprep.mubr.f32.mxu0 0.0
      %3499 = vmatmul.mubr.f32.gmra.mxu0 %v3332
      %v3500 = vpop.f32.mrf.mxu0
      %v3501 = vadd.f32 %v3323, %v3500
      %v3502 = vpop.f32.mrf.mxu0
      %3503 = vmatprep.mubr.f32.mxu0 0.0
      %3504 = vmatmul.mubr.f32.gmra.mxu0 %v3335
      %v3505 = vpop.f32.mrf.mxu0
      %v3506 = vadd.f32 %v3323, %v3505
      %v3507 = vpop.f32.mrf.mxu0
      %3508 = vmatprep.mubr.f32.mxu0 0.0
      %3509 = vmatmul.mubr.f32.gmra.mxu0 %v3338
      %v3510 = vpop.f32.mrf.mxu0
      %v3511 = vadd.f32 %v3323, %v3510
      %v3512 = vpop.f32.mrf.mxu0
      %3513 = vmatprep.mubr.f32.mxu0 0.0
      %3514 = vmatmul.mubr.f32.gmra.mxu0 %v3341
      %v3515 = vpop.f32.mrf.mxu0
      %v3516 = vadd.f32 %v3323, %v3515
      %v3517 = vpop.f32.mrf.mxu0
      %3518 = vmatprep.mubr.f32.mxu0 0.0
      %3519 = vmatmul.mubr.f32.gmra.mxu0 %v3344
      %v3520 = vpop.f32.mrf.mxu0
      %v3521 = vadd.f32 %v3323, %v3520
      %v3522 = vpop.f32.mrf.mxu0
      %3523 = vmatprep.mubr.f32.mxu0 0.0
      %3524 = vmatmul.mubr.f32.gmra.mxu0 %v3347
      %v3525 = vpop.f32.mrf.mxu0
      %v3526 = vadd.f32 %v3323, %v3525
      %v3527 = vpop.f32.mrf.mxu0
      %3528 = vmatprep.mubr.f32.mxu0 0.0
      %3529 = vmatmul.mubr.f32.gmra.mxu0 %v3350
      %v3530 = vpop.f32.mrf.mxu0
      %v3531 = vadd.f32 %v3323, %v3530
      %v3532 = vpop.f32.mrf.mxu0
      %3533 = vmatprep.mubr.f32.mxu0 0.0
      %3534 = vmatmul.mubr.f32.gmra.mxu0 %v3353
      %v3535 = vpop.f32.mrf.mxu0
      %v3536 = vadd.f32 %v3323, %v3535
      %v3537 = vpop.f32.mrf.mxu0
      %3538 = vmatprep.mubr.f32.mxu0 0.0
      %3539 = vmatmul.mubr.f32.gmra.mxu0 %v3356
      %v3540 = vpop.f32.mrf.mxu0
      %v3541 = vadd.f32 %v3323, %v3540
      %v3542 = vpop.f32.mrf.mxu0
      %3543 = vmatprep.mubr.f32.mxu0 0.0
      %3544 = vmatmul.mubr.f32.gmra.mxu0 %v3359
      %v3545 = vpop.f32.mrf.mxu0
      %v3546 = vadd.f32 %v3323, %v3545
      %v3547 = vpop.f32.mrf.mxu0
      %3548 = vmatprep.mubr.f32.mxu0 0.0
      %3549 = vmatmul.mubr.f32.gmra.mxu0 %v3362
      %v3550 = vpop.f32.mrf.mxu0
      %v3551 = vadd.f32 %v3323, %v3550
      %v3552 = vpop.f32.mrf.mxu0
      %3553 = vmatprep.mubr.f32.mxu0 0.0
      %3554 = vmatmul.mubr.f32.gmra.mxu0 %v3365
      %v3555 = vpop.f32.mrf.mxu0
      %v3556 = vadd.f32 %v3323, %v3555
      %v3557 = vpop.f32.mrf.mxu0
      %3558 = vmatprep.mubr.f32.mxu0 0.0
      %3559 = vmatmul.mubr.f32.gmra.mxu0 %v3368
      %v3560 = vpop.f32.mrf.mxu0
      %v3561 = vadd.f32 %v3323, %v3560
      %v3562 = vpop.f32.mrf.mxu0
      %3563 = vmatprep.mubr.f32.mxu0 0.0
      %3564 = vmatmul.mubr.f32.gmra.mxu0 %v3371
      %v3565 = vpop.f32.mrf.mxu0
      %v3566 = vadd.f32 %v3323, %v3565
      %v3567 = vpop.f32.mrf.mxu0
      %3568 = vmatprep.mubr.f32.mxu0 0.0
      %3569 = vmatmul.mubr.f32.gmra.mxu0 %v3374
      %v3570 = vpop.f32.mrf.mxu0
      %v3571 = vadd.f32 %v3323, %v3570
      %v3572 = vpop.f32.mrf.mxu0
      %3573 = vmatprep.mubr.f32.mxu0 0.0
      %3574 = vmatmul.mubr.f32.gmra.mxu0 %v3377
      %v3575 = vpop.f32.mrf.mxu0
      %v3576 = vadd.f32 %v3323, %v3575
      %v3577 = vpop.f32.mrf.mxu0
      %3578 = vmatprep.mubr.f32.mxu0 0.0
      %3579 = vmatmul.mubr.f32.gmra.mxu0 %v3380
      %v3580 = vpop.f32.mrf.mxu0
      %v3581 = vadd.f32 %v3323, %v3580
      %v3582 = vpop.f32.mrf.mxu0
      %3583 = vmatprep.mubr.f32.mxu0 0.0
      %3584 = vmatmul.mubr.f32.gmra.mxu0 %v3383
      %v3585 = vpop.f32.mrf.mxu0
      %v3586 = vadd.f32 %v3323, %v3585
      %v3587 = vpop.f32.mrf.mxu0
      %3588 = vmatprep.mubr.f32.mxu0 0.0
      %3589 = vmatmul.mubr.f32.gmra.mxu0 %v3386
      %v3590 = vpop.f32.mrf.mxu0
      %v3591 = vadd.f32 %v3323, %v3590
      %v3592 = vpop.f32.mrf.mxu0
      %3593 = vmatprep.mubr.f32.mxu0 0.0
      %3594 = vmatmul.mubr.f32.gmra.mxu0 %v3389
      %v3595 = vpop.f32.mrf.mxu0
      %v3596 = vadd.f32 %v3323, %v3595
      %v3597 = vpop.f32.mrf.mxu0
      %3598 = vmatprep.mubr.f32.mxu0 0.0
      %3599 = vmatmul.mubr.f32.gmra.mxu0 %v3392
      %v3600 = vpop.f32.mrf.mxu0
      %v3601 = vadd.f32 %v3323, %v3600
      %v3602 = vpop.f32.mrf.mxu0
      %3603 = vmatprep.mubr.f32.mxu0 0.0
      %3604 = vmatmul.mubr.f32.gmra.mxu0 %v3395
      %v3605 = vpop.f32.mrf.mxu0
      %v3606 = vadd.f32 %v3323, %v3605
      %v3607 = vpop.f32.mrf.mxu0
      %3608 = vmatprep.mubr.f32.mxu0 0.0
      %3609 = vmatmul.mubr.f32.gmra.mxu0 %v3398
      %v3610 = vpop.f32.mrf.mxu0
      %v3611 = vadd.f32 %v3323, %v3610
      %v3612 = vpop.f32.mrf.mxu0
      %3613 = vmatprep.mubr.f32.mxu0 0.0
      %3614 = vmatmul.mubr.f32.gmra.mxu0 %v3401
      %v3615 = vpop.f32.mrf.mxu0
      %v3616 = vadd.f32 %v3323, %v3615
      %v3617 = vpop.f32.mrf.mxu0
      %3618 = vmatprep.mubr.f32.mxu0 0.0
      %3619 = vmatmul.mubr.f32.gmra.mxu0 %v3404
      %v3620 = vpop.f32.mrf.mxu0
      %v3621 = vadd.f32 %v3323, %v3620
      %v3622 = vpop.f32.mrf.mxu0
      %3623 = vmatprep.mubr.f32.mxu0 0.0
      %3624 = vmatmul.mubr.f32.gmra.mxu0 %v3407
      %v3625 = vpop.f32.mrf.mxu0
      %v3626 = vadd.f32 %v3323, %v3625
      %v3627 = vpop.f32.mrf.mxu0
      %3628 = vmatprep.mubr.f32.mxu0 0.0
      %3629 = vmatmul.mubr.f32.gmra.mxu0 %v3410
      %v3630 = vpop.f32.mrf.mxu0
      %v3631 = vadd.f32 %v3323, %v3630
      %v3632 = vpop.f32.mrf.mxu0
      %3633 = vmatprep.mubr.f32.mxu0 0.0
      %3634 = vmatmul.mubr.f32.gmra.mxu0 %v3413
      %v3635 = vpop.f32.mrf.mxu0
      %v3636 = vadd.f32 %v3323, %v3635
      %v3637 = vpop.f32.mrf.mxu0
      %3638 = vmatprep.mubr.f32.mxu0 0.0
      %3639 = vmatmul.mubr.f32.gmra.mxu0 %v3416
      %v3640 = vpop.f32.mrf.mxu0
      %v3641 = vadd.f32 %v3323, %v3640
      %v3642 = vpop.f32.mrf.mxu0
      %3643 = vmatprep.mubr.f32.mxu0 0.0
      %3644 = vmatmul.mubr.f32.gmra.mxu0 %v3419
      %v3645 = vpop.f32.mrf.mxu0
      %v3646 = vadd.f32 %v3323, %v3645
      %v3647 = vpop.f32.mrf.mxu0
      %3648 = vdwg.mxu0
      %v3649 = vadd.f32 %v341, %v3491
      %v3650 = vadd.f32 %v343, %v3496
      %v3651 = vadd.f32 %v346, %v3501
      %v3652 = vadd.f32 %v348, %v3506
      %v3653 = vadd.f32 %v351, %v3511
      %v3654 = vadd.f32 %v353, %v3516
      %v3655 = vadd.f32 %v356, %v3521
      %v3656 = vadd.f32 %v358, %v3526
      %v3657 = vadd.f32 %v361, %v3531
      %v3658 = vadd.f32 %v363, %v3536
      %v3659 = vadd.f32 %v366, %v3541
      %v3660 = vadd.f32 %v368, %v3546
      %v3661 = vadd.f32 %v371, %v3551
      %v3662 = vadd.f32 %v373, %v3556
      %v3663 = vadd.f32 %v376, %v3561
      %v3664 = vadd.f32 %v378, %v3566
      %v3665 = vadd.f32 %v381, %v3571
      %v3666 = vadd.f32 %v383, %v3576
      %v3667 = vadd.f32 %v386, %v3581
      %v3668 = vadd.f32 %v388, %v3586
      %v3669 = vadd.f32 %v391, %v3591
      %v3670 = vadd.f32 %v393, %v3596
      %v3671 = vadd.f32 %v396, %v3601
      %v3672 = vadd.f32 %v398, %v3606
      %v3673 = vadd.f32 %v401, %v3611
      %v3674 = vadd.f32 %v403, %v3616
      %v3675 = vadd.f32 %v406, %v3621
      %v3676 = vadd.f32 %v408, %v3626
      %v3677 = vadd.f32 %v411, %v3631
      %v3678 = vadd.f32 %v413, %v3636
      %v3679 = vadd.f32 %v500, %v3641
      %v3680 = vadd.f32 %v502, %v3646
      %v3681 = vmax.f32 %v3649, 0.0
      %v3682 = vmax.f32 %v3650, 0.0
      %v3683 = vmax.f32 %v3651, 0.0
      %v3684 = vmax.f32 %v3652, 0.0
      %v3685 = vmax.f32 %v3653, 0.0
      %v3686 = vmax.f32 %v3654, 0.0
      %v3687 = vmax.f32 %v3655, 0.0
      %v3688 = vmax.f32 %v3656, 0.0
      %v3689 = vmax.f32 %v3657, 0.0
      %v3690 = vmax.f32 %v3658, 0.0
      %v3691 = vmax.f32 %v3659, 0.0
      %v3692 = vmax.f32 %v3660, 0.0
      %v3693 = vmax.f32 %v3661, 0.0
      %v3694 = vmax.f32 %v3662, 0.0
      %v3695 = vmax.f32 %v3663, 0.0
      %v3696 = vmax.f32 %v3664, 0.0
      %v3697 = vmax.f32 %v3665, 0.0
      %v3698 = vmax.f32 %v3666, 0.0
      %v3699 = vmax.f32 %v3667, 0.0
      %v3700 = vmax.f32 %v3668, 0.0
      %v3701 = vmax.f32 %v3669, 0.0
      %v3702 = vmax.f32 %v3670, 0.0
      %v3703 = vmax.f32 %v3671, 0.0
      %v3704 = vmax.f32 %v3672, 0.0
      %v3705 = vmax.f32 %v3673, 0.0
      %v3706 = vmax.f32 %v3674, 0.0
      %v3707 = vmax.f32 %v3675, 0.0
      %v3708 = vmax.f32 %v3676, 0.0
      %v3709 = vmax.f32 %v3677, 0.0
      %v3710 = vmax.f32 %v3678, 0.0
      %v3711 = vmax.f32 %v3679, 0.0
      %v3712 = vmax.f32 %v3680, 0.0
      %3713 = vst.msk [vmem:[%s224] sm:$0xff] %vm1321, %v3681
      %3714 = vst.msk [vmem:[%s224 + $0x8] sm:$0xff] %vm1321, %v3682
      %3715 = vst.msk [vmem:[%s224 + $0x10] sm:$0xff] %vm1321, %v3683
      %3716 = vst.msk [vmem:[%s224 + $0x18] sm:$0xff] %vm1321, %v3684
      %3717 = vst.msk [vmem:[%s224 + $0x20] sm:$0xff] %vm1321, %v3685
      %3718 = vst.msk [vmem:[%s224 + $0x28] sm:$0xff] %vm1321, %v3686
      %3719 = vst.msk [vmem:[%s224 + $0x30] sm:$0xff] %vm1321, %v3687
      %3720 = vst.msk [vmem:[%s224 + $0x38] sm:$0xff] %vm1321, %v3688
      %3721 = vst.msk [vmem:[%s224 + $0x40] sm:$0xff] %vm1321, %v3689
      %3722 = vst.msk [vmem:[%s224 + $0x48] sm:$0xff] %vm1321, %v3690
      %3723 = vst.msk [vmem:[%s224 + $0x50] sm:$0xff] %vm1321, %v3691
      %3724 = vst.msk [vmem:[%s224 + $0x58] sm:$0xff] %vm1321, %v3692
      %3725 = vst.msk [vmem:[%s224 + $0x60] sm:$0xff] %vm1321, %v3693
      %3726 = vst.msk [vmem:[%s224 + $0x68] sm:$0xff] %vm1321, %v3694
      %3727 = vst.msk [vmem:[%s224 + $0x70] sm:$0xff] %vm1321, %v3695
      %3728 = vst.msk [vmem:[%s224 + $0x78] sm:$0xff] %vm1321, %v3696
      %3729 = vst.msk [vmem:[%s224 + $0x80] sm:$0xff] %vm1321, %v3697
      %3730 = vst.msk [vmem:[%s224 + $0x88] sm:$0xff] %vm1321, %v3698
      %3731 = vst.msk [vmem:[%s224 + $0x90] sm:$0xff] %vm1321, %v3699
      %3732 = vst.msk [vmem:[%s224 + $0x98] sm:$0xff] %vm1321, %v3700
      %3733 = vst.msk [vmem:[%s224 + $0xa0] sm:$0xff] %vm1321, %v3701
      %3734 = vst.msk [vmem:[%s224 + $0xa8] sm:$0xff] %vm1321, %v3702
      %3735 = vst.msk [vmem:[%s224 + $0xb0] sm:$0xff] %vm1321, %v3703
      %3736 = vst.msk [vmem:[%s224 + $0xb8] sm:$0xff] %vm1321, %v3704
      %3737 = vst.msk [vmem:[%s224 + $0xc0] sm:$0xff] %vm1321, %v3705
      %3738 = vst.msk [vmem:[%s224 + $0xc8] sm:$0xff] %vm1321, %v3706
      %3739 = vst.msk [vmem:[%s224 + $0xd0] sm:$0xff] %vm1321, %v3707
      %3740 = vst.msk [vmem:[%s224 + $0xd8] sm:$0xff] %vm1321, %v3708
      %3741 = vst.msk [vmem:[%s224 + $0xe0] sm:$0xff] %vm1321, %v3709
      %3742 = vst.msk [vmem:[%s224 + $0xe8] sm:$0xff] %vm1321, %v3710
      %3743 = vst.msk [vmem:[%s224 + $0xf0] sm:$0xff] %vm1321, %v3711
      %3744 = vst.msk [vmem:[%s224 + $0xf8] sm:$0xff] %vm1321, %v3712
      %p3745 = scmp.lt.s32.totalorder %s16, 1
      %s3746 = scalar_select %p3745, %s16, 1
      %s3747 = smul.addr %s3746, 32
      %s3748 = smul.addr %s3747, 8
      %s3749 = scalar_lea.vmem %s5, %s3748
      // Predicated region
      $region41: #{tpu_custom_call.1} parent=39 // pred_check
        %p3750 = pneg %p144
      $region42: #{tpu_custom_call.1} parent=39 // pred_check_branch
        %3752 = sbr.rel (%p3750) target = $region44
      $region43: #{tpu_custom_call.1} parent=39 // pred_region
        _
      $region44: #{tpu_custom_call.1} parent=39 // pred_fallthru
        _
    $region40: #{tpu_custom_call.1} parent=5 // pred_fallthru
      _
    %p3753 = scmp.le.s32.totalorder 2, %s11
    // Predicated region
    $region45: #{tpu_custom_call.1} parent=5 // pred_check
      %p3754 = pneg %p3753
    $region46: #{tpu_custom_call.1} parent=5 // pred_check_branch
      %3756 = sbr.rel (%p3754) target = $region48
    $region47: #{tpu_custom_call.1} parent=5 // pred_region
      %s3757 = ssub.s32 %s11, 2
      // Predicated region
      $region49: #{tpu_custom_call.1} parent=47 // pred_check
        %p3758 = pneg %p150
      $region50: #{tpu_custom_call.1} parent=47 // pred_check_branch
        %3760 = sbr.rel (%p3758) target = $region52
      $region51: #{tpu_custom_call.1} parent=47 // pred_region
        %p3761 = scmp.lt.s32.totalorder %s17, 1
        %s3762 = scalar_select %p3761, %s17, 1
        %s3763 = smul.addr %s3762, 32
        %s3764 = smul.addr %s3763, 8
        %s3765 = scalar_lea.vmem %s5, %s3764
      $region52: #{tpu_custom_call.1} parent=47 // pred_fallthru
        _
    $region48: #{tpu_custom_call.1} parent=5 // pred_fallthru
      _
  $region6: #{tpu_custom_call.1} parent=0 // loop_footer
    %s15 = sadd.s32 1, %s11
  $region7: #{tpu_custom_call.1} parent=0 // loop_footer_branch
    %10 = sbr.rel target = $region3
  $region8: #{tpu_custom_call.1} parent=0 // loop_exit
    _

</llo_original>
